<compile_context>
chip_gen: v5e
topology: v5e:2x2
jax: 0.10.0
libtpu: 0.0.40
codegen_flags: <defaults>
</compile_context>

<pallas_src>
import numpy as np
import jax
import jax.numpy as jnp
from jax.experimental import pallas as pl
from jax.experimental.pallas import tpu as pltpu


def lightnet_kernel(x_ref, bcat_ref, acat_ref, w1_ref, b1_ref, w2_ref, b2_ref, o_ref):
    # x_ref    (1, C, HW)  bf16   one image, pixels on lanes
    # bcat_ref (HW, 2R)    bf16   [Re(V^T) | Im(V^T)]           (stage-1 factor)
    # acat_ref (2R, 2*HW)  bf16   [[Re(U^T), Im(U^T)], [-Im(U^T), Re(U^T)]]
    # w1/b1/w2/b2          f32    SMEM (1x1-conv weights/biases, read as scalars)
    # o_ref    (1, C, HW)  f32
    C = o_ref.shape[1]
    HW = o_ref.shape[2]
    F = w1_ref.shape[0]

    x = x_ref[0]                                                        # (C, HW) bf16

    # --- low-pass filter |ifft2(mask*fft2(x))| as two small lane-dense MXU matmuls
    z = jnp.dot(x, bcat_ref[...], preferred_element_type=jnp.float32)   # (C, 2R)
    ri = jnp.dot(z.astype(jnp.bfloat16), acat_ref[...],
                 preferred_element_type=jnp.float32)                    # (C, 2*HW)
    re = ri[:, :HW]                                                     # lane-aligned
    im = ri[:, HW:]
    light = jnp.sqrt(re * re + im * im)                                 # (C, HW) f32

    # --- conv1x1 -> ReLU -> conv1x1 on the VPU with SMEM scalar weights (f32)
    lrows = [light[c:c + 1, :] for c in range(C)]                       # (1, HW) rows
    hrows = []
    for f in range(F):
        acc = lrows[0] * w1_ref[f, 0]
        for c in range(1, C):
            acc = acc + lrows[c] * w1_ref[f, c]
        hrows.append(jnp.maximum(acc + b1_ref[f], 0.0))
    orows = []
    for o in range(C):
        acc = hrows[0] * w2_ref[o, 0]
        for f in range(1, F):
            acc = acc + hrows[f] * w2_ref[o, f]
        # residual + clamp(0, 1)
        orows.append(jnp.clip(acc + b2_ref[o] + lrows[o], 0.0, 1.0))

    o_ref[0] = jnp.concatenate(orows, axis=0).astype(o_ref.dtype)


def _lowpass_factors_1d(n, cutoff):
    """P_n = ifft(mask * fft(.)) = U_n @ V_n, rank 2*cutoff (numpy, host-side)."""
    k = np.arange(n)
    kept = np.concatenate([np.arange(cutoff), np.arange(n - cutoff, n)])
    dft = np.exp(-2j * np.pi * np.outer(k, k) / n)
    u = np.conj(dft)[:, kept] / n          # (n, 2c)
    v = dft[kept, :]                       # (2c, n)
    return u, v


def build_lowpass_factors(h, w, cutoff=3, dtype=jnp.bfloat16):
    """Precompute (once, outside the per-call path) the packed low-rank factors.

    light_complex = (x_flat @ B) @ A with B = (V_H (x) V_W)^T, A = (U_H (x) U_W)^T.
    Packed real forms: Bcat = [Re(B)|Im(B)] (HW, 2R); Acat = [[Re(A),Im(A)],[-Im(A),Re(A)]]
    (2R, 2*HW) so that (x @ Bcat) @ Acat = [Re | Im] along lanes.
    """
    uh, vh = _lowpass_factors_1d(h, cutoff)
    uw, vw = _lowpass_factors_1d(w, cutoff)
    u2 = np.kron(uh, uw)                   # (HW, R), R = (2c)^2
    v2 = np.kron(vh, vw)                   # (R, HW)
    b = v2.T                               # (HW, R) complex
    a = u2.T                               # (R, HW) complex
    bcat = np.concatenate([b.real, b.imag], axis=1)                 # (HW, 2R)
    acat = np.block([[a.real, a.imag], [-a.imag, a.real]])          # (2R, 2*HW)
    return jnp.asarray(bcat, dtype), jnp.asarray(acat, dtype)


def lightnet_forward(x, w1, b1, w2, b2, bcat, acat):
    N, C, H, W = x.shape
    HW = H * W
    R2 = bcat.shape[1]

    # Free, lane-dense layout: one image-channel per row, pixels on the lane axis.
    x2 = x.reshape(N, C, HW).astype(jnp.bfloat16)

    out = pl.pallas_call(
        lightnet_kernel,
        out_shape=jax.ShapeDtypeStruct((N, C, HW), jnp.float32),
        grid=(N,),                                     # >= 2 steps -> both v7x TCs
        in_specs=[
            pl.BlockSpec((1, C, HW), lambda n: (n, 0, 0)),          # pixels
            pl.BlockSpec((HW, R2), lambda n: (0, 0)),               # stage-1 factor
            pl.BlockSpec((R2, 2 * HW), lambda n: (0, 0)),           # stage-2 factor
            pl.BlockSpec(memory_space=pltpu.MemorySpace.SMEM),      # w1 (F, C)
            pl.BlockSpec(memory_space=pltpu.MemorySpace.SMEM),      # b1 (F,)
            pl.BlockSpec(memory_space=pltpu.MemorySpace.SMEM),      # w2 (C, F)
            pl.BlockSpec(memory_space=pltpu.MemorySpace.SMEM),      # b2 (C,)
        ],
        out_specs=pl.BlockSpec((1, C, HW), lambda n: (n, 0, 0)),
        compiler_params=pltpu.CompilerParams(
            dimension_semantics=("parallel",),
            vmem_limit_bytes=32 * 1024 * 1024,
        ),
    )(x2, bcat, acat,
      w1.astype(jnp.float32), b1.astype(jnp.float32),
      w2.astype(jnp.float32), b2.astype(jnp.float32))
    return out.reshape(N, C, H, W)


def reference_forward(x, w1, b1, w2, b2, cutoff=3):
    """Host-side numpy reference mirroring the PyTorch module (float64)."""
    x = np.asarray(x, np.float64)
    _, _, H, W = x.shape
    xf = np.fft.fftn(x, axes=(-2, -1))
    u = np.arange(H)
    v = np.arange(W)
    mh = ((u < cutoff) | (u >= H - cutoff)).astype(np.float64)
    mw = ((v < cutoff) | (v >= W - cutoff)).astype(np.float64)
    light = np.abs(np.fft.ifftn(xf * (mh[:, None] * mw[None, :]), axes=(-2, -1)))
    w1 = np.asarray(w1, np.float64); b1 = np.asarray(b1, np.float64)
    w2 = np.asarray(w2, np.float64); b2 = np.asarray(b2, np.float64)
    h = np.maximum(np.einsum('fc,nchw->nfhw', w1, light) + b1[None, :, None, None], 0.0)
    y = np.einsum('of,nfhw->nohw', w2, h) + b2[None, :, None, None]
    return np.clip(y + light, 0.0, 1.0)


if __name__ == "__main__":
    n_feat = 8
    N, C, H, W = 2, 3, 16, 16
    cutoff = 3

    key = jax.random.PRNGKey(0)
    k1, k2, k3, k4, k5 = jax.random.split(key, 5)
    w1 = jax.random.normal(k1, (n_feat, C), jnp.float32) * 0.2
    b1 = jax.random.normal(k2, (n_feat,), jnp.float32) * 0.1
    w2 = jax.random.normal(k3, (C, n_feat), jnp.float32) * 0.2
    b2 = jax.random.normal(k4, (C,), jnp.float32) * 0.1
    x = jax.random.uniform(k5, (N, C, H, W), jnp.float32)

    # Precompute the low-rank filter factors ONCE, outside the per-call path.
    bcat, acat = build_lowpass_factors(H, W, cutoff)

    fwd = jax.jit(lightnet_forward)
    out = jax.block_until_ready(fwd(x, w1, b1, w2, b2, bcat, acat))
    assert out.shape == (N, C, H, W)

    ref = reference_forward(np.asarray(x), np.asarray(w1), np.asarray(b1),
                            np.asarray(w2), np.asarray(b2), cutoff)
    err = float(np.max(np.abs(np.asarray(out, np.float64) - ref)))
    # bf16 single-pass MXU filter; observed error ~1e-3, budget 1e-2.
    assert err < 1e-2, err

    print("KERNEL_OK")
</pallas_src>

<mosaic_0001>
module attributes {stable_mosaic.version = 11 : i64} {
  func.func @lightnet_kernel(%arg0: i32, %arg1: memref<1x3x256xbf16, #tpu.memory_space<vmem>>, %arg2: memref<256x72xbf16, #tpu.memory_space<vmem>>, %arg3: memref<72x512xbf16, #tpu.memory_space<vmem>>, %arg4: memref<8x3xf32, #tpu.memory_space<smem>>, %arg5: memref<8xf32, #tpu.memory_space<smem>>, %arg6: memref<3x8xf32, #tpu.memory_space<smem>>, %arg7: memref<3xf32, #tpu.memory_space<smem>>, %arg8: memref<1x3x256xf32, #tpu.memory_space<vmem>>) attributes {dimension_semantics = [#tpu.dimension_semantics<parallel>], iteration_bounds = array<i64: 2>, scalar_prefetch = 0 : i64, scratch_operands = 0 : i64, tpu.core_type = #tpu.core_type<tc>, window_params = [{transform_indices = @transform_0, window_bounds = array<i64: 1, 3, 256>}, {pipeline_mode = #tpu.pipeline_mode<synchronous>, transform_indices = @transform_1, window_bounds = array<i64: 256, 72>}, {pipeline_mode = #tpu.pipeline_mode<synchronous>, transform_indices = @transform_2, window_bounds = array<i64: 72, 512>}, {transform_indices = @transform_3, window_bounds = array<i64: 8, 3>}, {transform_indices = @transform_4, window_bounds = array<i64: 8>}, {transform_indices = @transform_5, window_bounds = array<i64: 3, 8>}, {transform_indices = @transform_6, window_bounds = array<i64: 3>}, {transform_indices = @transform_7, window_bounds = array<i64: 1, 3, 256>}]} {
    %c0 = arith.constant 0 : index
    %c0_0 = arith.constant 0 : index
    %c0_1 = arith.constant 0 : index
    %0 = vector.load %arg1[%c0, %c0_0, %c0_1] : memref<1x3x256xbf16, #tpu.memory_space<vmem>>, vector<1x3x256xbf16>
    %1 = vector.shape_cast %0 : vector<1x3x256xbf16> to vector<3x256xbf16>
    %c0_2 = arith.constant 0 : index
    %c0_3 = arith.constant 0 : index
    %2 = vector.load %arg2[%c0_2, %c0_3] : memref<256x72xbf16, #tpu.memory_space<vmem>>, vector<256x72xbf16>
    %cst = arith.constant dense<0.000000e+00> : vector<3x72xf32>
    %3 = tpu.matmul %1, %2, %cst {dimension_numbers = #tpu.dot_dimension_numbers<[1], [0], [0], [1], [0, 0, 1, 1], [], []>} : vector<3x256xbf16>, vector<256x72xbf16>, vector<3x72xf32> -> vector<3x72xf32>
    %4 = arith.truncf %3 : vector<3x72xf32> to vector<3x72xbf16>
    %c0_4 = arith.constant 0 : index
    %c0_5 = arith.constant 0 : index
    %5 = vector.load %arg3[%c0_4, %c0_5] : memref<72x512xbf16, #tpu.memory_space<vmem>>, vector<72x512xbf16>
    %cst_6 = arith.constant dense<0.000000e+00> : vector<3x512xf32>
    %6 = tpu.matmul %4, %5, %cst_6 {dimension_numbers = #tpu.dot_dimension_numbers<[1], [0], [0], [1], [0, 0, 1, 1], [], []>} : vector<3x72xbf16>, vector<72x512xbf16>, vector<3x512xf32> -> vector<3x512xf32>
    %7 = vector.extract_strided_slice %6 {offsets = [0, 0], sizes = [3, 256], strides = [1, 1]} : vector<3x512xf32> to vector<3x256xf32>
    %8 = vector.extract_strided_slice %6 {offsets = [0, 256], sizes = [3, 256], strides = [1, 1]} : vector<3x512xf32> to vector<3x256xf32>
    %9 = arith.mulf %7, %7 : vector<3x256xf32>
    %10 = arith.mulf %8, %8 : vector<3x256xf32>
    %11 = arith.addf %9, %10 : vector<3x256xf32>
    %12 = math.sqrt %11 : vector<3x256xf32>
    %13 = vector.extract_strided_slice %12 {offsets = [0, 0], sizes = [1, 256], strides = [1, 1]} : vector<3x256xf32> to vector<1x256xf32>
    %14 = vector.extract_strided_slice %12 {offsets = [1, 0], sizes = [1, 256], strides = [1, 1]} : vector<3x256xf32> to vector<1x256xf32>
    %15 = vector.extract_strided_slice %12 {offsets = [2, 0], sizes = [1, 256], strides = [1, 1]} : vector<3x256xf32> to vector<1x256xf32>
    %c0_7 = arith.constant 0 : index
    %c0_8 = arith.constant 0 : index
    %16 = memref.load %arg4[%c0_7, %c0_8] : memref<8x3xf32, #tpu.memory_space<smem>>
    %17 = vector.broadcast %16 : f32 to vector<1x256xf32>
    %18 = arith.mulf %13, %17 : vector<1x256xf32>
    %c0_9 = arith.constant 0 : index
    %c1 = arith.constant 1 : index
    %19 = memref.load %arg4[%c0_9, %c1] : memref<8x3xf32, #tpu.memory_space<smem>>
    %20 = vector.broadcast %19 : f32 to vector<1x256xf32>
    %21 = arith.mulf %14, %20 : vector<1x256xf32>
    %22 = arith.addf %18, %21 : vector<1x256xf32>
    %c0_10 = arith.constant 0 : index
    %c2 = arith.constant 2 : index
    %23 = memref.load %arg4[%c0_10, %c2] : memref<8x3xf32, #tpu.memory_space<smem>>
    %24 = vector.broadcast %23 : f32 to vector<1x256xf32>
    %25 = arith.mulf %15, %24 : vector<1x256xf32>
    %26 = arith.addf %22, %25 : vector<1x256xf32>
    %c0_11 = arith.constant 0 : index
    %27 = memref.load %arg5[%c0_11] : memref<8xf32, #tpu.memory_space<smem>>
    %28 = vector.broadcast %27 : f32 to vector<1x256xf32>
    %29 = arith.addf %26, %28 : vector<1x256xf32>
    %cst_12 = arith.constant 0.000000e+00 : f32
    %30 = vector.broadcast %cst_12 : f32 to vector<1x256xf32>
    %31 = arith.maximumf %29, %30 : vector<1x256xf32>
    %c1_13 = arith.constant 1 : index
    %c0_14 = arith.constant 0 : index
    %32 = memref.load %arg4[%c1_13, %c0_14] : memref<8x3xf32, #tpu.memory_space<smem>>
    %33 = vector.broadcast %32 : f32 to vector<1x256xf32>
    %34 = arith.mulf %13, %33 : vector<1x256xf32>
    %c1_15 = arith.constant 1 : index
    %c1_16 = arith.constant 1 : index
    %35 = memref.load %arg4[%c1_15, %c1_16] : memref<8x3xf32, #tpu.memory_space<smem>>
    %36 = vector.broadcast %35 : f32 to vector<1x256xf32>
    %37 = arith.mulf %14, %36 : vector<1x256xf32>
    %38 = arith.addf %34, %37 : vector<1x256xf32>
    %c1_17 = arith.constant 1 : index
    %c2_18 = arith.constant 2 : index
    %39 = memref.load %arg4[%c1_17, %c2_18] : memref<8x3xf32, #tpu.memory_space<smem>>
    %40 = vector.broadcast %39 : f32 to vector<1x256xf32>
    %41 = arith.mulf %15, %40 : vector<1x256xf32>
    %42 = arith.addf %38, %41 : vector<1x256xf32>
    %c1_19 = arith.constant 1 : index
    %43 = memref.load %arg5[%c1_19] : memref<8xf32, #tpu.memory_space<smem>>
    %44 = vector.broadcast %43 : f32 to vector<1x256xf32>
    %45 = arith.addf %42, %44 : vector<1x256xf32>
    %cst_20 = arith.constant 0.000000e+00 : f32
    %46 = vector.broadcast %cst_20 : f32 to vector<1x256xf32>
    %47 = arith.maximumf %45, %46 : vector<1x256xf32>
    %c2_21 = arith.constant 2 : index
    %c0_22 = arith.constant 0 : index
    %48 = memref.load %arg4[%c2_21, %c0_22] : memref<8x3xf32, #tpu.memory_space<smem>>
    %49 = vector.broadcast %48 : f32 to vector<1x256xf32>
    %50 = arith.mulf %13, %49 : vector<1x256xf32>
    %c2_23 = arith.constant 2 : index
    %c1_24 = arith.constant 1 : index
    %51 = memref.load %arg4[%c2_23, %c1_24] : memref<8x3xf32, #tpu.memory_space<smem>>
    %52 = vector.broadcast %51 : f32 to vector<1x256xf32>
    %53 = arith.mulf %14, %52 : vector<1x256xf32>
    %54 = arith.addf %50, %53 : vector<1x256xf32>
    %c2_25 = arith.constant 2 : index
    %c2_26 = arith.constant 2 : index
    %55 = memref.load %arg4[%c2_25, %c2_26] : memref<8x3xf32, #tpu.memory_space<smem>>
    %56 = vector.broadcast %55 : f32 to vector<1x256xf32>
    %57 = arith.mulf %15, %56 : vector<1x256xf32>
    %58 = arith.addf %54, %57 : vector<1x256xf32>
    %c2_27 = arith.constant 2 : index
    %59 = memref.load %arg5[%c2_27] : memref<8xf32, #tpu.memory_space<smem>>
    %60 = vector.broadcast %59 : f32 to vector<1x256xf32>
    %61 = arith.addf %58, %60 : vector<1x256xf32>
    %cst_28 = arith.constant 0.000000e+00 : f32
    %62 = vector.broadcast %cst_28 : f32 to vector<1x256xf32>
    %63 = arith.maximumf %61, %62 : vector<1x256xf32>
    %c3 = arith.constant 3 : index
    %c0_29 = arith.constant 0 : index
    %64 = memref.load %arg4[%c3, %c0_29] : memref<8x3xf32, #tpu.memory_space<smem>>
    %65 = vector.broadcast %64 : f32 to vector<1x256xf32>
    %66 = arith.mulf %13, %65 : vector<1x256xf32>
    %c3_30 = arith.constant 3 : index
    %c1_31 = arith.constant 1 : index
    %67 = memref.load %arg4[%c3_30, %c1_31] : memref<8x3xf32, #tpu.memory_space<smem>>
    %68 = vector.broadcast %67 : f32 to vector<1x256xf32>
    %69 = arith.mulf %14, %68 : vector<1x256xf32>
    %70 = arith.addf %66, %69 : vector<1x256xf32>
    %c3_32 = arith.constant 3 : index
    %c2_33 = arith.constant 2 : index
    %71 = memref.load %arg4[%c3_32, %c2_33] : memref<8x3xf32, #tpu.memory_space<smem>>
    %72 = vector.broadcast %71 : f32 to vector<1x256xf32>
    %73 = arith.mulf %15, %72 : vector<1x256xf32>
    %74 = arith.addf %70, %73 : vector<1x256xf32>
    %c3_34 = arith.constant 3 : index
    %75 = memref.load %arg5[%c3_34] : memref<8xf32, #tpu.memory_space<smem>>
    %76 = vector.broadcast %75 : f32 to vector<1x256xf32>
    %77 = arith.addf %74, %76 : vector<1x256xf32>
    %cst_35 = arith.constant 0.000000e+00 : f32
    %78 = vector.broadcast %cst_35 : f32 to vector<1x256xf32>
    %79 = arith.maximumf %77, %78 : vector<1x256xf32>
    %c4 = arith.constant 4 : index
    %c0_36 = arith.constant 0 : index
    %80 = memref.load %arg4[%c4, %c0_36] : memref<8x3xf32, #tpu.memory_space<smem>>
    %81 = vector.broadcast %80 : f32 to vector<1x256xf32>
    %82 = arith.mulf %13, %81 : vector<1x256xf32>
    %c4_37 = arith.constant 4 : index
    %c1_38 = arith.constant 1 : index
    %83 = memref.load %arg4[%c4_37, %c1_38] : memref<8x3xf32, #tpu.memory_space<smem>>
    %84 = vector.broadcast %83 : f32 to vector<1x256xf32>
    %85 = arith.mulf %14, %84 : vector<1x256xf32>
    %86 = arith.addf %82, %85 : vector<1x256xf32>
    %c4_39 = arith.constant 4 : index
    %c2_40 = arith.constant 2 : index
    %87 = memref.load %arg4[%c4_39, %c2_40] : memref<8x3xf32, #tpu.memory_space<smem>>
    %88 = vector.broadcast %87 : f32 to vector<1x256xf32>
    %89 = arith.mulf %15, %88 : vector<1x256xf32>
    %90 = arith.addf %86, %89 : vector<1x256xf32>
    %c4_41 = arith.constant 4 : index
    %91 = memref.load %arg5[%c4_41] : memref<8xf32, #tpu.memory_space<smem>>
    %92 = vector.broadcast %91 : f32 to vector<1x256xf32>
    %93 = arith.addf %90, %92 : vector<1x256xf32>
    %cst_42 = arith.constant 0.000000e+00 : f32
    %94 = vector.broadcast %cst_42 : f32 to vector<1x256xf32>
    %95 = arith.maximumf %93, %94 : vector<1x256xf32>
    %c5 = arith.constant 5 : index
    %c0_43 = arith.constant 0 : index
    %96 = memref.load %arg4[%c5, %c0_43] : memref<8x3xf32, #tpu.memory_space<smem>>
    %97 = vector.broadcast %96 : f32 to vector<1x256xf32>
    %98 = arith.mulf %13, %97 : vector<1x256xf32>
    %c5_44 = arith.constant 5 : index
    %c1_45 = arith.constant 1 : index
    %99 = memref.load %arg4[%c5_44, %c1_45] : memref<8x3xf32, #tpu.memory_space<smem>>
    %100 = vector.broadcast %99 : f32 to vector<1x256xf32>
    %101 = arith.mulf %14, %100 : vector<1x256xf32>
    %102 = arith.addf %98, %101 : vector<1x256xf32>
    %c5_46 = arith.constant 5 : index
    %c2_47 = arith.constant 2 : index
    %103 = memref.load %arg4[%c5_46, %c2_47] : memref<8x3xf32, #tpu.memory_space<smem>>
    %104 = vector.broadcast %103 : f32 to vector<1x256xf32>
    %105 = arith.mulf %15, %104 : vector<1x256xf32>
    %106 = arith.addf %102, %105 : vector<1x256xf32>
    %c5_48 = arith.constant 5 : index
    %107 = memref.load %arg5[%c5_48] : memref<8xf32, #tpu.memory_space<smem>>
    %108 = vector.broadcast %107 : f32 to vector<1x256xf32>
    %109 = arith.addf %106, %108 : vector<1x256xf32>
    %cst_49 = arith.constant 0.000000e+00 : f32
    %110 = vector.broadcast %cst_49 : f32 to vector<1x256xf32>
    %111 = arith.maximumf %109, %110 : vector<1x256xf32>
    %c6 = arith.constant 6 : index
    %c0_50 = arith.constant 0 : index
    %112 = memref.load %arg4[%c6, %c0_50] : memref<8x3xf32, #tpu.memory_space<smem>>
    %113 = vector.broadcast %112 : f32 to vector<1x256xf32>
    %114 = arith.mulf %13, %113 : vector<1x256xf32>
    %c6_51 = arith.constant 6 : index
    %c1_52 = arith.constant 1 : index
    %115 = memref.load %arg4[%c6_51, %c1_52] : memref<8x3xf32, #tpu.memory_space<smem>>
    %116 = vector.broadcast %115 : f32 to vector<1x256xf32>
    %117 = arith.mulf %14, %116 : vector<1x256xf32>
    %118 = arith.addf %114, %117 : vector<1x256xf32>
    %c6_53 = arith.constant 6 : index
    %c2_54 = arith.constant 2 : index
    %119 = memref.load %arg4[%c6_53, %c2_54] : memref<8x3xf32, #tpu.memory_space<smem>>
    %120 = vector.broadcast %119 : f32 to vector<1x256xf32>
    %121 = arith.mulf %15, %120 : vector<1x256xf32>
    %122 = arith.addf %118, %121 : vector<1x256xf32>
    %c6_55 = arith.constant 6 : index
    %123 = memref.load %arg5[%c6_55] : memref<8xf32, #tpu.memory_space<smem>>
    %124 = vector.broadcast %123 : f32 to vector<1x256xf32>
    %125 = arith.addf %122, %124 : vector<1x256xf32>
    %cst_56 = arith.constant 0.000000e+00 : f32
    %126 = vector.broadcast %cst_56 : f32 to vector<1x256xf32>
    %127 = arith.maximumf %125, %126 : vector<1x256xf32>
    %c7 = arith.constant 7 : index
    %c0_57 = arith.constant 0 : index
    %128 = memref.load %arg4[%c7, %c0_57] : memref<8x3xf32, #tpu.memory_space<smem>>
    %129 = vector.broadcast %128 : f32 to vector<1x256xf32>
    %130 = arith.mulf %13, %129 : vector<1x256xf32>
    %c7_58 = arith.constant 7 : index
    %c1_59 = arith.constant 1 : index
    %131 = memref.load %arg4[%c7_58, %c1_59] : memref<8x3xf32, #tpu.memory_space<smem>>
    %132 = vector.broadcast %131 : f32 to vector<1x256xf32>
    %133 = arith.mulf %14, %132 : vector<1x256xf32>
    %134 = arith.addf %130, %133 : vector<1x256xf32>
    %c7_60 = arith.constant 7 : index
    %c2_61 = arith.constant 2 : index
    %135 = memref.load %arg4[%c7_60, %c2_61] : memref<8x3xf32, #tpu.memory_space<smem>>
    %136 = vector.broadcast %135 : f32 to vector<1x256xf32>
    %137 = arith.mulf %15, %136 : vector<1x256xf32>
    %138 = arith.addf %134, %137 : vector<1x256xf32>
    %c7_62 = arith.constant 7 : index
    %139 = memref.load %arg5[%c7_62] : memref<8xf32, #tpu.memory_space<smem>>
    %140 = vector.broadcast %139 : f32 to vector<1x256xf32>
    %141 = arith.addf %138, %140 : vector<1x256xf32>
    %cst_63 = arith.constant 0.000000e+00 : f32
    %142 = vector.broadcast %cst_63 : f32 to vector<1x256xf32>
    %143 = arith.maximumf %141, %142 : vector<1x256xf32>
    %c0_64 = arith.constant 0 : index
    %c0_65 = arith.constant 0 : index
    %144 = memref.load %arg6[%c0_64, %c0_65] : memref<3x8xf32, #tpu.memory_space<smem>>
    %145 = vector.broadcast %144 : f32 to vector<1x256xf32>
    %146 = arith.mulf %31, %145 : vector<1x256xf32>
    %c0_66 = arith.constant 0 : index
    %c1_67 = arith.constant 1 : index
    %147 = memref.load %arg6[%c0_66, %c1_67] : memref<3x8xf32, #tpu.memory_space<smem>>
    %148 = vector.broadcast %147 : f32 to vector<1x256xf32>
    %149 = arith.mulf %47, %148 : vector<1x256xf32>
    %150 = arith.addf %146, %149 : vector<1x256xf32>
    %c0_68 = arith.constant 0 : index
    %c2_69 = arith.constant 2 : index
    %151 = memref.load %arg6[%c0_68, %c2_69] : memref<3x8xf32, #tpu.memory_space<smem>>
    %152 = vector.broadcast %151 : f32 to vector<1x256xf32>
    %153 = arith.mulf %63, %152 : vector<1x256xf32>
    %154 = arith.addf %150, %153 : vector<1x256xf32>
    %c0_70 = arith.constant 0 : index
    %c3_71 = arith.constant 3 : index
    %155 = memref.load %arg6[%c0_70, %c3_71] : memref<3x8xf32, #tpu.memory_space<smem>>
    %156 = vector.broadcast %155 : f32 to vector<1x256xf32>
    %157 = arith.mulf %79, %156 : vector<1x256xf32>
    %158 = arith.addf %154, %157 : vector<1x256xf32>
    %c0_72 = arith.constant 0 : index
    %c4_73 = arith.constant 4 : index
    %159 = memref.load %arg6[%c0_72, %c4_73] : memref<3x8xf32, #tpu.memory_space<smem>>
    %160 = vector.broadcast %159 : f32 to vector<1x256xf32>
    %161 = arith.mulf %95, %160 : vector<1x256xf32>
    %162 = arith.addf %158, %161 : vector<1x256xf32>
    %c0_74 = arith.constant 0 : index
    %c5_75 = arith.constant 5 : index
    %163 = memref.load %arg6[%c0_74, %c5_75] : memref<3x8xf32, #tpu.memory_space<smem>>
    %164 = vector.broadcast %163 : f32 to vector<1x256xf32>
    %165 = arith.mulf %111, %164 : vector<1x256xf32>
    %166 = arith.addf %162, %165 : vector<1x256xf32>
    %c0_76 = arith.constant 0 : index
    %c6_77 = arith.constant 6 : index
    %167 = memref.load %arg6[%c0_76, %c6_77] : memref<3x8xf32, #tpu.memory_space<smem>>
    %168 = vector.broadcast %167 : f32 to vector<1x256xf32>
    %169 = arith.mulf %127, %168 : vector<1x256xf32>
    %170 = arith.addf %166, %169 : vector<1x256xf32>
    %c0_78 = arith.constant 0 : index
    %c7_79 = arith.constant 7 : index
    %171 = memref.load %arg6[%c0_78, %c7_79] : memref<3x8xf32, #tpu.memory_space<smem>>
    %172 = vector.broadcast %171 : f32 to vector<1x256xf32>
    %173 = arith.mulf %143, %172 : vector<1x256xf32>
    %174 = arith.addf %170, %173 : vector<1x256xf32>
    %c0_80 = arith.constant 0 : index
    %175 = memref.load %arg7[%c0_80] : memref<3xf32, #tpu.memory_space<smem>>
    %176 = vector.broadcast %175 : f32 to vector<1x256xf32>
    %177 = arith.addf %174, %176 : vector<1x256xf32>
    %178 = arith.addf %177, %13 : vector<1x256xf32>
    %cst_81 = arith.constant 0.000000e+00 : f32
    %cst_82 = arith.constant 1.000000e+00 : f32
    %179 = vector.broadcast %cst_81 : f32 to vector<1x256xf32>
    %180 = arith.maximumf %179, %178 : vector<1x256xf32>
    %181 = vector.broadcast %cst_82 : f32 to vector<1x256xf32>
    %182 = arith.minimumf %181, %180 : vector<1x256xf32>
    %c1_83 = arith.constant 1 : index
    %c0_84 = arith.constant 0 : index
    %183 = memref.load %arg6[%c1_83, %c0_84] : memref<3x8xf32, #tpu.memory_space<smem>>
    %184 = vector.broadcast %183 : f32 to vector<1x256xf32>
    %185 = arith.mulf %31, %184 : vector<1x256xf32>
    %c1_85 = arith.constant 1 : index
    %c1_86 = arith.constant 1 : index
    %186 = memref.load %arg6[%c1_85, %c1_86] : memref<3x8xf32, #tpu.memory_space<smem>>
    %187 = vector.broadcast %186 : f32 to vector<1x256xf32>
    %188 = arith.mulf %47, %187 : vector<1x256xf32>
    %189 = arith.addf %185, %188 : vector<1x256xf32>
    %c1_87 = arith.constant 1 : index
    %c2_88 = arith.constant 2 : index
    %190 = memref.load %arg6[%c1_87, %c2_88] : memref<3x8xf32, #tpu.memory_space<smem>>
    %191 = vector.broadcast %190 : f32 to vector<1x256xf32>
    %192 = arith.mulf %63, %191 : vector<1x256xf32>
    %193 = arith.addf %189, %192 : vector<1x256xf32>
    %c1_89 = arith.constant 1 : index
    %c3_90 = arith.constant 3 : index
    %194 = memref.load %arg6[%c1_89, %c3_90] : memref<3x8xf32, #tpu.memory_space<smem>>
    %195 = vector.broadcast %194 : f32 to vector<1x256xf32>
    %196 = arith.mulf %79, %195 : vector<1x256xf32>
    %197 = arith.addf %193, %196 : vector<1x256xf32>
    %c1_91 = arith.constant 1 : index
    %c4_92 = arith.constant 4 : index
    %198 = memref.load %arg6[%c1_91, %c4_92] : memref<3x8xf32, #tpu.memory_space<smem>>
    %199 = vector.broadcast %198 : f32 to vector<1x256xf32>
    %200 = arith.mulf %95, %199 : vector<1x256xf32>
    %201 = arith.addf %197, %200 : vector<1x256xf32>
    %c1_93 = arith.constant 1 : index
    %c5_94 = arith.constant 5 : index
    %202 = memref.load %arg6[%c1_93, %c5_94] : memref<3x8xf32, #tpu.memory_space<smem>>
    %203 = vector.broadcast %202 : f32 to vector<1x256xf32>
    %204 = arith.mulf %111, %203 : vector<1x256xf32>
    %205 = arith.addf %201, %204 : vector<1x256xf32>
    %c1_95 = arith.constant 1 : index
    %c6_96 = arith.constant 6 : index
    %206 = memref.load %arg6[%c1_95, %c6_96] : memref<3x8xf32, #tpu.memory_space<smem>>
    %207 = vector.broadcast %206 : f32 to vector<1x256xf32>
    %208 = arith.mulf %127, %207 : vector<1x256xf32>
    %209 = arith.addf %205, %208 : vector<1x256xf32>
    %c1_97 = arith.constant 1 : index
    %c7_98 = arith.constant 7 : index
    %210 = memref.load %arg6[%c1_97, %c7_98] : memref<3x8xf32, #tpu.memory_space<smem>>
    %211 = vector.broadcast %210 : f32 to vector<1x256xf32>
    %212 = arith.mulf %143, %211 : vector<1x256xf32>
    %213 = arith.addf %209, %212 : vector<1x256xf32>
    %c1_99 = arith.constant 1 : index
    %214 = memref.load %arg7[%c1_99] : memref<3xf32, #tpu.memory_space<smem>>
    %215 = vector.broadcast %214 : f32 to vector<1x256xf32>
    %216 = arith.addf %213, %215 : vector<1x256xf32>
    %217 = arith.addf %216, %14 : vector<1x256xf32>
    %cst_100 = arith.constant 0.000000e+00 : f32
    %cst_101 = arith.constant 1.000000e+00 : f32
    %218 = vector.broadcast %cst_100 : f32 to vector<1x256xf32>
    %219 = arith.maximumf %218, %217 : vector<1x256xf32>
    %220 = vector.broadcast %cst_101 : f32 to vector<1x256xf32>
    %221 = arith.minimumf %220, %219 : vector<1x256xf32>
    %c2_102 = arith.constant 2 : index
    %c0_103 = arith.constant 0 : index
    %222 = memref.load %arg6[%c2_102, %c0_103] : memref<3x8xf32, #tpu.memory_space<smem>>
    %223 = vector.broadcast %222 : f32 to vector<1x256xf32>
    %224 = arith.mulf %31, %223 : vector<1x256xf32>
    %c2_104 = arith.constant 2 : index
    %c1_105 = arith.constant 1 : index
    %225 = memref.load %arg6[%c2_104, %c1_105] : memref<3x8xf32, #tpu.memory_space<smem>>
    %226 = vector.broadcast %225 : f32 to vector<1x256xf32>
    %227 = arith.mulf %47, %226 : vector<1x256xf32>
    %228 = arith.addf %224, %227 : vector<1x256xf32>
    %c2_106 = arith.constant 2 : index
    %c2_107 = arith.constant 2 : index
    %229 = memref.load %arg6[%c2_106, %c2_107] : memref<3x8xf32, #tpu.memory_space<smem>>
    %230 = vector.broadcast %229 : f32 to vector<1x256xf32>
    %231 = arith.mulf %63, %230 : vector<1x256xf32>
    %232 = arith.addf %228, %231 : vector<1x256xf32>
    %c2_108 = arith.constant 2 : index
    %c3_109 = arith.constant 3 : index
    %233 = memref.load %arg6[%c2_108, %c3_109] : memref<3x8xf32, #tpu.memory_space<smem>>
    %234 = vector.broadcast %233 : f32 to vector<1x256xf32>
    %235 = arith.mulf %79, %234 : vector<1x256xf32>
    %236 = arith.addf %232, %235 : vector<1x256xf32>
    %c2_110 = arith.constant 2 : index
    %c4_111 = arith.constant 4 : index
    %237 = memref.load %arg6[%c2_110, %c4_111] : memref<3x8xf32, #tpu.memory_space<smem>>
    %238 = vector.broadcast %237 : f32 to vector<1x256xf32>
    %239 = arith.mulf %95, %238 : vector<1x256xf32>
    %240 = arith.addf %236, %239 : vector<1x256xf32>
    %c2_112 = arith.constant 2 : index
    %c5_113 = arith.constant 5 : index
    %241 = memref.load %arg6[%c2_112, %c5_113] : memref<3x8xf32, #tpu.memory_space<smem>>
    %242 = vector.broadcast %241 : f32 to vector<1x256xf32>
    %243 = arith.mulf %111, %242 : vector<1x256xf32>
    %244 = arith.addf %240, %243 : vector<1x256xf32>
    %c2_114 = arith.constant 2 : index
    %c6_115 = arith.constant 6 : index
    %245 = memref.load %arg6[%c2_114, %c6_115] : memref<3x8xf32, #tpu.memory_space<smem>>
    %246 = vector.broadcast %245 : f32 to vector<1x256xf32>
    %247 = arith.mulf %127, %246 : vector<1x256xf32>
    %248 = arith.addf %244, %247 : vector<1x256xf32>
    %c2_116 = arith.constant 2 : index
    %c7_117 = arith.constant 7 : index
    %249 = memref.load %arg6[%c2_116, %c7_117] : memref<3x8xf32, #tpu.memory_space<smem>>
    %250 = vector.broadcast %249 : f32 to vector<1x256xf32>
    %251 = arith.mulf %143, %250 : vector<1x256xf32>
    %252 = arith.addf %248, %251 : vector<1x256xf32>
    %c2_118 = arith.constant 2 : index
    %253 = memref.load %arg7[%c2_118] : memref<3xf32, #tpu.memory_space<smem>>
    %254 = vector.broadcast %253 : f32 to vector<1x256xf32>
    %255 = arith.addf %252, %254 : vector<1x256xf32>
    %256 = arith.addf %255, %15 : vector<1x256xf32>
    %cst_119 = arith.constant 0.000000e+00 : f32
    %cst_120 = arith.constant 1.000000e+00 : f32
    %257 = vector.broadcast %cst_119 : f32 to vector<1x256xf32>
    %258 = arith.maximumf %257, %256 : vector<1x256xf32>
    %259 = vector.broadcast %cst_120 : f32 to vector<1x256xf32>
    %260 = arith.minimumf %259, %258 : vector<1x256xf32>
    %261 = tpu.concatenate %182, %221, %260 in 0 : vector<1x256xf32>, vector<1x256xf32>, vector<1x256xf32> -> vector<3x256xf32>
    %c0_121 = arith.constant 0 : index
    %c0_122 = arith.constant 0 : index
    %c0_123 = arith.constant 0 : index
    %262 = vector.load %arg8[%c0_121, %c0_122, %c0_123] : memref<1x3x256xf32, #tpu.memory_space<vmem>>, vector<1x3x256xf32>
    %263 = vector.shape_cast %262 : vector<1x3x256xf32> to vector<3x256xf32>
    %264 = vector.shape_cast %261 : vector<3x256xf32> to vector<1x3x256xf32>
    tpu.vector_store %arg8[%c0_121, %c0_122, %c0_123], %264 {strides = array<i32>} : memref<1x3x256xf32, #tpu.memory_space<vmem>>, vector<1x3x256xf32>,
    return
  }
  func.func @transform_0(%arg0: i32) -> (i32, i32, i32) {
    %c0_i32 = arith.constant 0 : i32
    %c0_i32_0 = arith.constant 0 : i32
    %c0_i32_1 = arith.constant 0 : i32
    return %arg0, %c0_i32, %c0_i32_0 : i32, i32, i32
  }
  func.func @transform_1(%arg0: i32) -> (i32, i32) {
    %c0_i32 = arith.constant 0 : i32
    %c0_i32_0 = arith.constant 0 : i32
    %c0_i32_1 = arith.constant 0 : i32
    return %c0_i32, %c0_i32_0 : i32, i32
  }
  func.func @transform_2(%arg0: i32) -> (i32, i32) {
    %c0_i32 = arith.constant 0 : i32
    %c0_i32_0 = arith.constant 0 : i32
    %c0_i32_1 = arith.constant 0 : i32
    return %c0_i32, %c0_i32_0 : i32, i32
  }
  func.func @transform_3(%arg0: i32) -> (i32, i32) {
    %c0_i32 = arith.constant 0 : i32
    %c0_i32_0 = arith.constant 0 : i32
    %c0_i32_1 = arith.constant 0 : i32
    return %c0_i32, %c0_i32_0 : i32, i32
  }
  func.func @transform_4(%arg0: i32) -> i32 {
    %c0_i32 = arith.constant 0 : i32
    %c0_i32_0 = arith.constant 0 : i32
    return %c0_i32 : i32
  }
  func.func @transform_5(%arg0: i32) -> (i32, i32) {
    %c0_i32 = arith.constant 0 : i32
    %c0_i32_0 = arith.constant 0 : i32
    %c0_i32_1 = arith.constant 0 : i32
    return %c0_i32, %c0_i32_0 : i32, i32
  }
  func.func @transform_6(%arg0: i32) -> i32 {
    %c0_i32 = arith.constant 0 : i32
    %c0_i32_0 = arith.constant 0 : i32
    return %c0_i32 : i32
  }
  func.func @transform_7(%arg0: i32) -> (i32, i32, i32) {
    %c0_i32 = arith.constant 0 : i32
    %c0_i32_0 = arith.constant 0 : i32
    %c0_i32_1 = arith.constant 0 : i32
    return %arg0, %c0_i32, %c0_i32_0 : i32, i32, i32
  }
}

</mosaic_0001>

<llo_original>
// kernel: lightnet_forward.1
$region0: #{lightnet_forward.1}
  #allocation0 [shape = 'u32[]', space=smem, size = 0x4, offset = 0x4, fixed_abs, tag = 'smem constant byte address 0x4 - core index']
  #allocation1 [shape = 'u32[72,128]{1,0:T(1,128)}', space=vmem, size = 0x9000, scoped, tag = 'internal scratch']
  %s0 = inlined_call_operand.vmem [shape: bf16[2,3,256], index: 0, kind: input, shape index: {}]
  %s1 = inlined_call_operand.vmem [shape: bf16[256,72], index: 1, kind: input, shape index: {}]
  %s2 = inlined_call_operand.vmem [shape: bf16[72,512], index: 2, kind: input, shape index: {}]
  %s3 = inlined_call_operand.vmem [shape: f32[8,3], index: 3, kind: input, shape index: {}]
  %s4 = inlined_call_operand.vmem [shape: f32[8], index: 4, kind: input, shape index: {}]
  %s5 = inlined_call_operand.vmem [shape: f32[3,8], index: 5, kind: input, shape index: {}]
  %s6 = inlined_call_operand.vmem [shape: f32[3], index: 6, kind: input, shape index: {}]
  %s7 = inlined_call_operand.vmem [shape: f32[2,3,256], index: 7, kind: output, shape index: {}]
  %s8 = sld [smem:[#allocation0]]
  $region77: #{lightnet_forward.1} parent=0
    _
  %s10 = ssub.s32 1, %s8
  %s11 = scalar_select 0, %s10, %s8
  $region1: #{lightnet_forward.1} parent=0
    #allocation2 [shape = 'u8[4096]{0}', space=smem, size = 0x1000, scoped, tag = 'input window, operand 3, single buffered']
    #allocation3 [shape = 's32[2]{0}', space=sflag, size = 0x8, scoped, tag = 'scoped memory for lightnet_forward.1']
    #allocation4 [shape = 'u8[512]{0}', space=smem, size = 0x200, scoped, tag = 'input window, operand 4, single buffered']
    #allocation5 [shape = 's32[1]{0}', space=sflag, size = 0x4, scoped, tag = 'scoped memory for lightnet_forward.1']
    #allocation6 [shape = 'u8[2048]{0}', space=smem, size = 0x800, scoped, tag = 'input window, operand 5, single buffered']
    #allocation7 [shape = 'u8[512]{0}', space=smem, size = 0x200, scoped, tag = 'input window, operand 6, single buffered']
    #allocation8 [shape = 's32[1]{0}', space=sflag, size = 0x4, scoped, tag = 'scoped memory for lightnet_forward.1']
    %12 = vsyncpa [#allocation3], 0
    %13 = vsyncpa [#allocation5], 0
    %14 = vsyncpa [#allocation8], 0
    loop: start=0, step=1, limit=4
    $region2: #{lightnet_forward.1} parent=1 // loop_pre_header
      _
    $region3: #{lightnet_forward.1} parent=1 // loop_header
      %s16 = sphi 0, %s20
      %p17 = scmp.ge.s32.totalorder %s16, 4
      %s26 = sphi 0, %s28
      %s29 = sphi 0, %s26
      %s30 = sphi 0, %s29
      %s46 = sphi 0, %s30
      %s50 = sphi 0, %s50
      %s52 = sphi 0, %s50
      %s53 = sphi 0, %s52
      %s67 = sphi 0, %s53
      %s71 = sphi 0, %s71
      %s73 = sphi 0, %s71
      %s74 = sphi 0, %s73
      %s88 = sphi 0, %s74
      %s92 = sphi 0, %s92
      %s94 = sphi 0, %s92
      %s95 = sphi 0, %s94
      %s109 = sphi 0, %s95
      %s113 = sphi 0, %s113
      %s115 = sphi 0, %s113
      %s116 = sphi 0, %s115
      %s130 = sphi 0, %s116
      %s134 = sphi 0, %s134
      %s136 = sphi 0, %s134
      %s137 = sphi 0, %s136
      %s151 = sphi 0, %s137
      %s155 = sphi 0, %s155
      %s157 = sphi 0, %s155
      %s158 = sphi 0, %s157
      %s172 = sphi 0, %s158
      %s178 = sphi 0, %s180
      %s181 = sphi 0, %s178
      %s182 = sphi 0, %s181
      %s198 = sphi 0, %s182
    $region4: #{lightnet_forward.1} parent=1 // loop_header_branch
      %19 = sbr.rel (%p17) target = $region8
    $region5: #{lightnet_forward.1} parent=1 // loop_body
      %s21 = ssub.s32 %s16, 1
      %s22 = ssub.s32 %s16, 2
      %s23 = sadd.s32 %s16, 1
      %s24 = ssub.s32 %s16, %s23
      %p25 = scmp.eq.s32.totalorder %s24, 0
      %s27 = sadd.s32 %s26, 1
      %s28 = scalar_select %p25, %s26, %s27
      %p31 = pneg %p25
      %p32 = scmp.eq.s32.totalorder %s16, 1
      %p33 = por %p31, %p32
      %p34 = scmp.ne.s32.totalorder %s26, %s29
      %p35 = scmp.eq.s32.totalorder %s16, 0
      %p36 = por %p34, %p35
      %p37 = scmp.ne.s32.totalorder %s26, %s29
      %p38 = scmp.eq.s32.totalorder %s21, 1
      %p39 = por %p37, %p38
      %p40 = scmp.ne.s32.totalorder %s29, %s30
      %p41 = scmp.eq.s32.totalorder %s21, 0
      %p42 = por %p40, %p41
      %p43 = scmp.ne.s32.totalorder %s29, %s30
      %p44 = scmp.eq.s32.totalorder %s22, 1
      %p45 = por %p43, %p44
      %p47 = scmp.ne.s32.totalorder %s30, %s46
      %p48 = scmp.eq.s32.totalorder %s22, 0
      %p49 = por %p47, %p48
      %s51 = sadd.s32 %s50, 1
      %p54 = scmp.eq.s32.totalorder %s16, 1
      %p55 = scmp.ne.s32.totalorder %s50, %s52
      %p56 = scmp.eq.s32.totalorder %s16, 0
      %p57 = por %p55, %p56
      %p58 = scmp.ne.s32.totalorder %s50, %s52
      %p59 = scmp.eq.s32.totalorder %s21, 1
      %p60 = por %p58, %p59
      %p61 = scmp.ne.s32.totalorder %s52, %s53
      %p62 = scmp.eq.s32.totalorder %s21, 0
      %p63 = por %p61, %p62
      %p64 = scmp.ne.s32.totalorder %s52, %s53
      %p65 = scmp.eq.s32.totalorder %s22, 1
      %p66 = por %p64, %p65
      %p68 = scmp.ne.s32.totalorder %s53, %s67
      %p69 = scmp.eq.s32.totalorder %s22, 0
      %p70 = por %p68, %p69
      %s72 = sadd.s32 %s71, 1
      %p75 = scmp.eq.s32.totalorder %s16, 1
      %p76 = scmp.ne.s32.totalorder %s71, %s73
      %p77 = scmp.eq.s32.totalorder %s16, 0
      %p78 = por %p76, %p77
      %p79 = scmp.ne.s32.totalorder %s71, %s73
      %p80 = scmp.eq.s32.totalorder %s21, 1
      %p81 = por %p79, %p80
      %p82 = scmp.ne.s32.totalorder %s73, %s74
      %p83 = scmp.eq.s32.totalorder %s21, 0
      %p84 = por %p82, %p83
      %p85 = scmp.ne.s32.totalorder %s73, %s74
      %p86 = scmp.eq.s32.totalorder %s22, 1
      %p87 = por %p85, %p86
      %p89 = scmp.ne.s32.totalorder %s74, %s88
      %p90 = scmp.eq.s32.totalorder %s22, 0
      %p91 = por %p89, %p90
      %s93 = sadd.s32 %s92, 1
      %p96 = scmp.eq.s32.totalorder %s16, 1
      %p97 = scmp.ne.s32.totalorder %s92, %s94
      %p98 = scmp.eq.s32.totalorder %s16, 0
      %p99 = por %p97, %p98
      %p100 = scmp.ne.s32.totalorder %s92, %s94
      %p101 = scmp.eq.s32.totalorder %s21, 1
      %p102 = por %p100, %p101
      %p103 = scmp.ne.s32.totalorder %s94, %s95
      %p104 = scmp.eq.s32.totalorder %s21, 0
      %p105 = por %p103, %p104
      %p106 = scmp.ne.s32.totalorder %s94, %s95
      %p107 = scmp.eq.s32.totalorder %s22, 1
      %p108 = por %p106, %p107
      %p110 = scmp.ne.s32.totalorder %s95, %s109
      %p111 = scmp.eq.s32.totalorder %s22, 0
      %p112 = por %p110, %p111
      %s114 = sadd.s32 %s113, 1
      %p117 = scmp.eq.s32.totalorder %s16, 1
      %p118 = scmp.ne.s32.totalorder %s113, %s115
      %p119 = scmp.eq.s32.totalorder %s16, 0
      %p120 = por %p118, %p119
      %p121 = scmp.ne.s32.totalorder %s113, %s115
      %p122 = scmp.eq.s32.totalorder %s21, 1
      %p123 = por %p121, %p122
      %p124 = scmp.ne.s32.totalorder %s115, %s116
      %p125 = scmp.eq.s32.totalorder %s21, 0
      %p126 = por %p124, %p125
      %p127 = scmp.ne.s32.totalorder %s115, %s116
      %p128 = scmp.eq.s32.totalorder %s22, 1
      %p129 = por %p127, %p128
      %p131 = scmp.ne.s32.totalorder %s116, %s130
      %p132 = scmp.eq.s32.totalorder %s22, 0
      %p133 = por %p131, %p132
      %s135 = sadd.s32 %s134, 1
      %p138 = scmp.eq.s32.totalorder %s16, 1
      %p139 = scmp.ne.s32.totalorder %s134, %s136
      %p140 = scmp.eq.s32.totalorder %s16, 0
      %p141 = por %p139, %p140
      %p142 = scmp.ne.s32.totalorder %s134, %s136
      %p143 = scmp.eq.s32.totalorder %s21, 1
      %p144 = por %p142, %p143
      %p145 = scmp.ne.s32.totalorder %s136, %s137
      %p146 = scmp.eq.s32.totalorder %s21, 0
      %p147 = por %p145, %p146
      %p148 = scmp.ne.s32.totalorder %s136, %s137
      %p149 = scmp.eq.s32.totalorder %s22, 1
      %p150 = por %p148, %p149
      %p152 = scmp.ne.s32.totalorder %s137, %s151
      %p153 = scmp.eq.s32.totalorder %s22, 0
      %p154 = por %p152, %p153
      %s156 = sadd.s32 %s155, 1
      %p159 = scmp.eq.s32.totalorder %s16, 1
      %p160 = scmp.ne.s32.totalorder %s155, %s157
      %p161 = scmp.eq.s32.totalorder %s16, 0
      %p162 = por %p160, %p161
      %p163 = scmp.ne.s32.totalorder %s155, %s157
      %p164 = scmp.eq.s32.totalorder %s21, 1
      %p165 = por %p163, %p164
      %p166 = scmp.ne.s32.totalorder %s157, %s158
      %p167 = scmp.eq.s32.totalorder %s21, 0
      %p168 = por %p166, %p167
      %p169 = scmp.ne.s32.totalorder %s157, %s158
      %p170 = scmp.eq.s32.totalorder %s22, 1
      %p171 = por %p169, %p170
      %p173 = scmp.ne.s32.totalorder %s158, %s172
      %p174 = scmp.eq.s32.totalorder %s22, 0
      %p175 = por %p173, %p174
      %s176 = ssub.s32 %s16, %s23
      %p177 = scmp.eq.s32.totalorder %s176, 0
      %s179 = sadd.s32 %s178, 1
      %s180 = scalar_select %p177, %s178, %s179
      %p183 = pneg %p177
      %p184 = scmp.eq.s32.totalorder %s16, 1
      %p185 = por %p183, %p184
      %p186 = scmp.ne.s32.totalorder %s178, %s181
      %p187 = scmp.eq.s32.totalorder %s16, 0
      %p188 = por %p186, %p187
      %p189 = scmp.ne.s32.totalorder %s178, %s181
      %p190 = scmp.eq.s32.totalorder %s21, 1
      %p191 = por %p189, %p190
      %p192 = scmp.ne.s32.totalorder %s181, %s182
      %p193 = scmp.eq.s32.totalorder %s21, 0
      %p194 = por %p192, %p193
      %p195 = scmp.ne.s32.totalorder %s181, %s182
      %p196 = scmp.eq.s32.totalorder %s22, 1
      %p197 = por %p195, %p196
      %p199 = scmp.ne.s32.totalorder %s182, %s198
      %p200 = scmp.eq.s32.totalorder %s22, 0
      %p201 = por %p199, %p200
      %p202 = scmp.le.s32.totalorder 1, %s16
      %p203 = scmp.lt.s32.totalorder %s16, 3
      %p204 = pnand %p202, %p203
      %p205 = pneg %p204
      // Predicated region
      $region9: #{lightnet_forward.1} parent=5 // pred_check
        _
      $region10: #{lightnet_forward.1} parent=5 // pred_check_branch
        %207 = sbr.rel (%p204) target = $region12
      $region11: #{lightnet_forward.1} parent=5 // pred_region
        %s208 = ssub.s32 %s16, 1
        // Predicated region
        $region13: #{lightnet_forward.1} parent=11 // pred_check
          %p209 = pneg %p63
        $region14: #{lightnet_forward.1} parent=11 // pred_check_branch
          %211 = sbr.rel (%p209) target = $region16
        $region15: #{lightnet_forward.1} parent=11 // pred_region
          _
        $region16: #{lightnet_forward.1} parent=11 // pred_fallthru
          _
        // Predicated region
        $region17: #{lightnet_forward.1} parent=11 // pred_check
          %p212 = pneg %p84
        $region18: #{lightnet_forward.1} parent=11 // pred_check_branch
          %214 = sbr.rel (%p212) target = $region20
        $region19: #{lightnet_forward.1} parent=11 // pred_region
          _
        $region20: #{lightnet_forward.1} parent=11 // pred_fallthru
          _
        // Predicated region
        $region21: #{lightnet_forward.1} parent=11 // pred_check
          %p215 = pneg %p105
        $region22: #{lightnet_forward.1} parent=11 // pred_check_branch
          %217 = sbr.rel (%p215) target = $region24
        $region23: #{lightnet_forward.1} parent=11 // pred_region
          %219 = vsyncadd [#allocation3], 0
          %s221 = sshll.u32 %s3, 4
          %s222 = int_to_ptr.vmem [resolvable:$true] %s221
          %224 = dma.vmem_to_smem %s222, 128, [#allocation2], [#allocation3]
        $region24: #{lightnet_forward.1} parent=11 // pred_fallthru
          _
        // Predicated region
        $region25: #{lightnet_forward.1} parent=11 // pred_check
          %p225 = pneg %p126
        $region26: #{lightnet_forward.1} parent=11 // pred_check_branch
          %227 = sbr.rel (%p225) target = $region28
        $region27: #{lightnet_forward.1} parent=11 // pred_region
          %229 = vsyncadd [#allocation5], 0
          %s231 = sshll.u32 %s4, 4
          %s232 = int_to_ptr.vmem [resolvable:$true] %s231
          %234 = dma.vmem_to_smem %s232, 16, [#allocation4], [#allocation5]
        $region28: #{lightnet_forward.1} parent=11 // pred_fallthru
          _
        // Predicated region
        $region29: #{lightnet_forward.1} parent=11 // pred_check
          %p235 = pneg %p147
        $region30: #{lightnet_forward.1} parent=11 // pred_check_branch
          %237 = sbr.rel (%p235) target = $region32
        $region31: #{lightnet_forward.1} parent=11 // pred_region
          %239 = vsyncadd [#allocation5], 0
          %s241 = sshll.u32 %s5, 4
          %s242 = int_to_ptr.vmem [resolvable:$true] %s241
          %244 = dma.vmem_to_smem %s242, 64, [#allocation6], [#allocation5]
        $region32: #{lightnet_forward.1} parent=11 // pred_fallthru
          _
        // Predicated region
        $region33: #{lightnet_forward.1} parent=11 // pred_check
          %p245 = pneg %p168
        $region34: #{lightnet_forward.1} parent=11 // pred_check_branch
          %247 = sbr.rel (%p245) target = $region36
        $region35: #{lightnet_forward.1} parent=11 // pred_region
          %249 = vsyncadd [#allocation8], 0
          %s251 = sshll.u32 %s6, 4
          %s252 = int_to_ptr.vmem [resolvable:$true] %s251
          %254 = dma.vmem_to_smem %s252, 16, [#allocation7], [#allocation8]
        $region36: #{lightnet_forward.1} parent=11 // pred_fallthru
          _
      $region12: #{lightnet_forward.1} parent=5 // pred_fallthru
        _
      %p255 = scmp.lt.s32.totalorder %s16, 2
      // Predicated region
      $region37: #{lightnet_forward.1} parent=5 // pred_check
        %p256 = pneg %p255
      $region38: #{lightnet_forward.1} parent=5 // pred_check_branch
        %258 = sbr.rel (%p256) target = $region40
      $region39: #{lightnet_forward.1} parent=5 // pred_region
        // Predicated region
        $region41: #{lightnet_forward.1} parent=39 // pred_check
          %p259 = pneg %p36
        $region42: #{lightnet_forward.1} parent=39 // pred_check_branch
          %261 = sbr.rel (%p259) target = $region44
        $region43: #{lightnet_forward.1} parent=39 // pred_region
          %p262 = scmp.lt.s32.totalorder %s16, 1
          %s263 = scalar_select %p262, %s16, 1
          %s264 = smul.addr %s263, 2
          %s265 = smul.addr %s264, 2
          %s266 = scalar_lea.vmem %s0, %s265
        $region44: #{lightnet_forward.1} parent=39 // pred_fallthru
          _
      $region40: #{lightnet_forward.1} parent=5 // pred_fallthru
        _
      %p267 = scmp.le.s32.totalorder 1, %s16
      %p268 = scmp.lt.s32.totalorder %s16, 3
      %p269 = pnand %p267, %p268
      %p270 = pneg %p269
      // Predicated region
      $region45: #{lightnet_forward.1} parent=5 // pred_check
        _
      $region46: #{lightnet_forward.1} parent=5 // pred_check_branch
        %272 = sbr.rel (%p269) target = $region48
      $region47: #{lightnet_forward.1} parent=5 // pred_region
        %s273 = ssub.s32 %s16, 1
        // Predicated region
        $region49: #{lightnet_forward.1} parent=47 // pred_check
          %p274 = pneg %p105
        $region50: #{lightnet_forward.1} parent=47 // pred_check_branch
          %276 = sbr.rel (%p274) target = $region52
        $region51: #{lightnet_forward.1} parent=47 // pred_region
          %278 = dma.done [#allocation3], 128
        $region52: #{lightnet_forward.1} parent=47 // pred_fallthru
          _
        // Predicated region
        $region53: #{lightnet_forward.1} parent=47 // pred_check
          %p279 = pneg %p126
        $region54: #{lightnet_forward.1} parent=47 // pred_check_branch
          %281 = sbr.rel (%p279) target = $region56
        $region55: #{lightnet_forward.1} parent=47 // pred_region
          %283 = dma.done [#allocation5], 16
        $region56: #{lightnet_forward.1} parent=47 // pred_fallthru
          _
        // Predicated region
        $region57: #{lightnet_forward.1} parent=47 // pred_check
          %p284 = pneg %p147
        $region58: #{lightnet_forward.1} parent=47 // pred_check_branch
          %286 = sbr.rel (%p284) target = $region60
        $region59: #{lightnet_forward.1} parent=47 // pred_region
          %288 = dma.done [#allocation5], 64
        $region60: #{lightnet_forward.1} parent=47 // pred_fallthru
          _
        // Predicated region
        $region61: #{lightnet_forward.1} parent=47 // pred_check
          %p289 = pneg %p168
        $region62: #{lightnet_forward.1} parent=47 // pred_check_branch
          %291 = sbr.rel (%p289) target = $region64
        $region63: #{lightnet_forward.1} parent=47 // pred_region
          %293 = dma.done [#allocation8], 16
        $region64: #{lightnet_forward.1} parent=47 // pred_fallthru
          _
        %294 = sfence
        %p295 = scmp.lt.s32.totalorder %s21, 1
        %s296 = scalar_select %p295, %s21, 1
        %s297 = smul.addr %s296, 2
        %s298 = smul.addr %s297, 2
        %s299 = scalar_lea.vmem %s0, %s298
        %p300 = pneg %p42
        %p301 = pneg %p39
        %p302 = pneg %p63
        %p303 = pneg %p60
        %p304 = pneg %p84
        %p305 = pneg %p81
        %p306 = pneg %p105
        %p307 = pneg %p102
        %p308 = pneg %p126
        %p309 = pneg %p123
        %p310 = pneg %p147
        %p311 = pneg %p144
        %p312 = pneg %p168
        %p313 = pneg %p165
        %p314 = pneg %p194
        %p315 = pneg %p191
        %p316 = scmp.lt.s32.totalorder %s21, 1
        %s317 = scalar_select %p316, %s21, 1
        %s318 = smul.addr %s317, 2
        %s319 = smul.addr %s318, 4
        %s320 = scalar_lea.vmem %s7, %s319
        %p321 = scmp.lt.s32.totalorder %s21, 1
        %s322 = scalar_select %p321, %s21, 1
        %s323 = smul.addr %s322, 2
        %s324 = smul.addr %s323, 2
        %s325 = scalar_lea.vmem %s0, %s324
        %p326 = scmp.lt.s32.totalorder %s21, 1
        %s327 = scalar_select %p326, %s21, 1
        %s328 = smul.addr %s327, 2
        %s329 = smul.addr %s328, 4
        %s330 = scalar_lea.vmem %s7, %s329
        %v332 = vld [vmem:[%s325] sm:$0xf]
        %v333 = vld [vmem:[%s1] sm:$0xf]
        %v334 = vld [vmem:[%s1 + $0x4] sm:$0xf]
        %v335 = vld [vmem:[%s1 + $0x8] sm:$0xf]
        %v336 = vld [vmem:[%s1 + $0xc] sm:$0xf]
        %v337 = vld [vmem:[%s1 + $0x10] sm:$0xf]
        %v338 = vld [vmem:[%s1 + $0x14] sm:$0xf]
        %v339 = vld [vmem:[%s1 + $0x18] sm:$0xf]
        %v340 = vld [vmem:[%s1 + $0x1c] sm:$0xf]
        %v341 = vld [vmem:[%s1 + $0x20] sm:$0xf]
        %v342 = vld [vmem:[%s1 + $0x24] sm:$0xf]
        %v343 = vld [vmem:[%s1 + $0x28] sm:$0xf]
        %v344 = vld [vmem:[%s1 + $0x2c] sm:$0xf]
        %v345 = vld [vmem:[%s1 + $0x30] sm:$0xf]
        %v346 = vld [vmem:[%s1 + $0x34] sm:$0xf]
        %v347 = vld [vmem:[%s1 + $0x38] sm:$0xf]
        %v348 = vld [vmem:[%s1 + $0x3c] sm:$0xf]
        %v349 = vld [vmem:[%s1 + $0x40] sm:$0xf]
        %v350 = vld [vmem:[%s1 + $0x44] sm:$0xf]
        %v351 = vld [vmem:[%s1 + $0x48] sm:$0xf]
        %v352 = vld [vmem:[%s1 + $0x4c] sm:$0xf]
        %v353 = vld [vmem:[%s1 + $0x50] sm:$0xf]
        %v354 = vld [vmem:[%s1 + $0x54] sm:$0xf]
        %v355 = vld [vmem:[%s1 + $0x58] sm:$0xf]
        %v356 = vld [vmem:[%s1 + $0x5c] sm:$0xf]
        %v357 = vld [vmem:[%s1 + $0x60] sm:$0xf]
        %v358 = vld [vmem:[%s1 + $0x64] sm:$0xf]
        %v359 = vld [vmem:[%s1 + $0x68] sm:$0xf]
        %v360 = vld [vmem:[%s1 + $0x6c] sm:$0xf]
        %v361 = vld [vmem:[%s1 + $0x70] sm:$0xf]
        %v362 = vld [vmem:[%s1 + $0x74] sm:$0xf]
        %v363 = vld [vmem:[%s1 + $0x78] sm:$0xf]
        %v364 = vld [vmem:[%s1 + $0x7c] sm:$0xf]
        %366 = vst [vmem:[#allocation1] ss:$4 sm:$0xff] %v332
        %v367 = vld.sshfl [vmem:[#allocation1] sm:$0xff pattern:$0x73625140]
        %v368 = vld.sshfl [vmem:[#allocation1 + $0x8] sm:$0xff pattern:$0x73625140]
        %v403 = vunpack.c.l.b16 %v333
        %v404 = vunpack.c.l.b16 %v334
        %v405 = vunpack.c.l.b16 %v335
        %v406 = vunpack.c.l.b16 %v336
        %v407 = vunpack.c.l.b16 %v337
        %v408 = vunpack.c.l.b16 %v338
        %v409 = vunpack.c.l.b16 %v339
        %v410 = vunpack.c.l.b16 %v340
        %v411 = vunpack.c.l.b16 %v341
        %v412 = vunpack.c.l.b16 %v342
        %v413 = vunpack.c.l.b16 %v343
        %v414 = vunpack.c.l.b16 %v344
        %v415 = vunpack.c.l.b16 %v345
        %v416 = vunpack.c.l.b16 %v346
        %v417 = vunpack.c.l.b16 %v347
        %v418 = vunpack.c.l.b16 %v348
        %v419 = vunpack.c.l.b16 %v349
        %v420 = vunpack.c.l.b16 %v350
        %v421 = vunpack.c.l.b16 %v351
        %v422 = vunpack.c.l.b16 %v352
        %v423 = vunpack.c.l.b16 %v353
        %v424 = vunpack.c.l.b16 %v354
        %v425 = vunpack.c.l.b16 %v355
        %v426 = vunpack.c.l.b16 %v356
        %v427 = vunpack.c.l.b16 %v357
        %v428 = vunpack.c.l.b16 %v358
        %v429 = vunpack.c.l.b16 %v359
        %v430 = vunpack.c.l.b16 %v360
        %v431 = vunpack.c.l.b16 %v361
        %v432 = vunpack.c.l.b16 %v362
        %v433 = vunpack.c.l.b16 %v363
        %v434 = vunpack.c.l.b16 %v364
        %v435 = vpack.c.b16 %v404, %v403
        %v436 = vpack.c.b16 %v406, %v405
        %v437 = vpack.c.b16 %v408, %v407
        %v438 = vpack.c.b16 %v410, %v409
        %v439 = vpack.c.b16 %v412, %v411
        %v440 = vpack.c.b16 %v414, %v413
        %v441 = vpack.c.b16 %v416, %v415
        %v442 = vpack.c.b16 %v418, %v417
        %v443 = vpack.c.b16 %v420, %v419
        %v444 = vpack.c.b16 %v422, %v421
        %v445 = vpack.c.b16 %v424, %v423
        %v446 = vpack.c.b16 %v426, %v425
        %v447 = vpack.c.b16 %v428, %v427
        %v448 = vpack.c.b16 %v430, %v429
        %v449 = vpack.c.b16 %v432, %v431
        %v450 = vpack.c.b16 %v434, %v433
        %467 = vmatpush.bf16.msra.mxu0 %v442
        %468 = vmatpush.bf16.msra.mxu0 %v441
        %469 = vmatpush.bf16.msra.mxu0 %v440
        %470 = vmatpush.bf16.msra.mxu0 %v439
        %471 = vmatpush.bf16.msra.mxu0 %v438
        %472 = vmatpush.bf16.msra.mxu0 %v437
        %473 = vmatpush.bf16.msra.mxu0 %v436
        %474 = vmatpush.bf16.msra.mxu0 %v435
        %475 = vmatmul.bf16.gmra.mxu0 %v367
        %v476 = vpop.f32.mrf.mxu0
        %v477 = vadd.f32 0.0, %v476
        %v478 = vpop.f32.mrf.mxu0
        %479 = vdwg.mxu0
        %480 = vmatpush.bf16.msra.mxu0 %v450
        %481 = vmatpush.bf16.msra.mxu0 %v449
        %482 = vmatpush.bf16.msra.mxu0 %v448
        %483 = vmatpush.bf16.msra.mxu0 %v447
        %484 = vmatpush.bf16.msra.mxu0 %v446
        %485 = vmatpush.bf16.msra.mxu0 %v445
        %486 = vmatpush.bf16.msra.mxu0 %v444
        %487 = vmatpush.bf16.msra.mxu0 %v443
        %488 = vmatmul.bf16.gmra.mxu0 %v368
        %v489 = vpop.f32.mrf.mxu0
        %v490 = vadd.f32 %v477, %v489
        %v491 = vpop.f32.mrf.mxu0
        %492 = vdwg.mxu0
        %v493 = vpack.c.bf16 %v490, %v490
        %v494 = vld [vmem:[%s2] sm:$0xff]
        %v495 = vld [vmem:[%s2 + $0x8] sm:$0xff]
        %v496 = vld [vmem:[%s2 + $0x10] sm:$0xff]
        %v497 = vld [vmem:[%s2 + $0x18] sm:$0xff]
        %v498 = vld [vmem:[%s2 + $0x20] sm:$0xff]
        %v499 = vld [vmem:[%s2 + $0x28] sm:$0xff]
        %v500 = vld [vmem:[%s2 + $0x30] sm:$0xff]
        %v501 = vld [vmem:[%s2 + $0x38] sm:$0xff]
        %v502 = vld [vmem:[%s2 + $0x40] sm:$0xff]
        %v503 = vld [vmem:[%s2 + $0x48] sm:$0xff]
        %v504 = vld [vmem:[%s2 + $0x50] sm:$0xff]
        %v505 = vld [vmem:[%s2 + $0x58] sm:$0xff]
        %v506 = vld [vmem:[%s2 + $0x60] sm:$0xff]
        %v507 = vld [vmem:[%s2 + $0x68] sm:$0xff]
        %v508 = vld [vmem:[%s2 + $0x70] sm:$0xff]
        %v509 = vld [vmem:[%s2 + $0x78] sm:$0xff]
        %v510 = vld [vmem:[%s2 + $0x80] sm:$0xff]
        %v511 = vld [vmem:[%s2 + $0x88] sm:$0xff]
        %v530 = vunpack.c.l.b16 %v494
        %v531 = vunpack.c.h.b16 %v494
        %v532 = vunpack.c.l.b16 %v495
        %v533 = vunpack.c.h.b16 %v495
        %v534 = vunpack.c.l.b16 %v496
        %v535 = vunpack.c.h.b16 %v496
        %v536 = vunpack.c.l.b16 %v497
        %v537 = vunpack.c.h.b16 %v497
        %v538 = vunpack.c.l.b16 %v498
        %v539 = vunpack.c.h.b16 %v498
        %v540 = vunpack.c.l.b16 %v499
        %v541 = vunpack.c.h.b16 %v499
        %v542 = vunpack.c.l.b16 %v500
        %v543 = vunpack.c.h.b16 %v500
        %v544 = vunpack.c.l.b16 %v501
        %v545 = vunpack.c.h.b16 %v501
        %v546 = vunpack.c.l.b16 %v502
        %v547 = vunpack.c.h.b16 %v502
        %v548 = vunpack.c.l.b16 %v503
        %v549 = vunpack.c.h.b16 %v503
        %v550 = vunpack.c.l.b16 %v504
        %v551 = vunpack.c.h.b16 %v504
        %v552 = vunpack.c.l.b16 %v505
        %v553 = vunpack.c.h.b16 %v505
        %v554 = vunpack.c.l.b16 %v506
        %v555 = vunpack.c.h.b16 %v506
        %v556 = vunpack.c.l.b16 %v507
        %v557 = vunpack.c.h.b16 %v507
        %v558 = vunpack.c.l.b16 %v508
        %v559 = vunpack.c.h.b16 %v508
        %v560 = vunpack.c.l.b16 %v509
        %v561 = vunpack.c.h.b16 %v509
        %v562 = vunpack.c.l.b16 %v510
        %v563 = vunpack.c.h.b16 %v510
        %v564 = vunpack.c.l.b16 %v511
        %v565 = vunpack.c.h.b16 %v511
        %v566 = vpack.c.b16 %v534, %v530
        %v567 = vpack.c.b16 %v535, %v531
        %v568 = vpack.c.b16 %v536, %v532
        %v569 = vpack.c.b16 %v537, %v533
        %v570 = vpack.c.b16 %v542, %v538
        %v571 = vpack.c.b16 %v543, %v539
        %v572 = vpack.c.b16 %v544, %v540
        %v573 = vpack.c.b16 %v545, %v541
        %v574 = vpack.c.b16 %v550, %v546
        %v575 = vpack.c.b16 %v551, %v547
        %v576 = vpack.c.b16 %v552, %v548
        %v577 = vpack.c.b16 %v553, %v549
        %v578 = vpack.c.b16 %v558, %v554
        %v579 = vpack.c.b16 %v559, %v555
        %v580 = vpack.c.b16 %v560, %v556
        %v581 = vpack.c.b16 %v561, %v557
        %v582 = vpack.c.b16 %v562, %v562
        %v583 = vpack.c.b16 %v563, %v563
        %v584 = vpack.c.b16 %v564, %v564
        %v585 = vpack.c.b16 %v565, %v565
        %vm602 = vcmask 588800
        %v604 = vsel %vm602, %v493, 0
        %vm606 = vcmask 1043456
        %v608 = vsel %vm606, %v582, 0
        %v611 = vsel %vm606, %v583, 0
        %v614 = vsel %vm606, %v584, 0
        %v617 = vsel %vm606, %v585, 0
        %619 = vmatpush.bf16.msra.mxu0 0
        %620 = vmatpush.bf16.msra.mxu0 0
        %621 = vmatpush.bf16.msra.mxu0 0
        %622 = vmatpush.bf16.msra.mxu0 %v608
        %623 = vmatpush.bf16.msra.mxu0 %v578
        %624 = vmatpush.bf16.msra.mxu0 %v574
        %625 = vmatpush.bf16.msra.mxu0 %v570
        %626 = vmatpush.bf16.msra.mxu0 %v566
        %627 = vmatmul.bf16.gmra.mxu0 %v604
        %v628 = vpop.f32.mrf.mxu0
        %v629 = vadd.f32 0.0, %v628
        %v630 = vpop.f32.mrf.mxu0
        %631 = vdwg.mxu0
        %632 = vmatpush.bf16.msra.mxu0 0
        %633 = vmatpush.bf16.msra.mxu0 0
        %634 = vmatpush.bf16.msra.mxu0 0
        %635 = vmatpush.bf16.msra.mxu0 %v611
        %636 = vmatpush.bf16.msra.mxu0 %v579
        %637 = vmatpush.bf16.msra.mxu0 %v575
        %638 = vmatpush.bf16.msra.mxu0 %v571
        %639 = vmatpush.bf16.msra.mxu0 %v567
        %640 = vmatmul.bf16.gmra.mxu0 %v604
        %v641 = vpop.f32.mrf.mxu0
        %v642 = vadd.f32 0.0, %v641
        %v643 = vpop.f32.mrf.mxu0
        %644 = vdwg.mxu0
        %645 = vmatpush.bf16.msra.mxu0 0
        %646 = vmatpush.bf16.msra.mxu0 0
        %647 = vmatpush.bf16.msra.mxu0 0
        %648 = vmatpush.bf16.msra.mxu0 %v614
        %649 = vmatpush.bf16.msra.mxu0 %v580
        %650 = vmatpush.bf16.msra.mxu0 %v576
        %651 = vmatpush.bf16.msra.mxu0 %v572
        %652 = vmatpush.bf16.msra.mxu0 %v568
        %653 = vmatmul.bf16.gmra.mxu0 %v604
        %v654 = vpop.f32.mrf.mxu0
        %v655 = vadd.f32 0.0, %v654
        %v656 = vpop.f32.mrf.mxu0
        %657 = vdwg.mxu0
        %658 = vmatpush.bf16.msra.mxu0 0
        %659 = vmatpush.bf16.msra.mxu0 0
        %660 = vmatpush.bf16.msra.mxu0 0
        %661 = vmatpush.bf16.msra.mxu0 %v617
        %662 = vmatpush.bf16.msra.mxu0 %v581
        %663 = vmatpush.bf16.msra.mxu0 %v577
        %664 = vmatpush.bf16.msra.mxu0 %v573
        %665 = vmatpush.bf16.msra.mxu0 %v569
        %666 = vmatmul.bf16.gmra.mxu0 %v604
        %v667 = vpop.f32.mrf.mxu0
        %v668 = vadd.f32 0.0, %v667
        %v669 = vpop.f32.mrf.mxu0
        %670 = vdwg.mxu0
        %v671 = vmul.f32 %v629, %v629
        %v672 = vmul.f32 %v642, %v642
        %v673 = vmul.f32 %v655, %v655
        %v674 = vmul.f32 %v668, %v668
        %v675 = vadd.f32 %v671, %v673
        %v676 = vadd.f32 %v672, %v674
        %v677 = vrsqrt.pop %v675
        %v678 = vmul.f32 %v677, %v675
        %v679 = vmul.f32 %v678, %v677
        %v680 = vmul.f32 0.5, %v679
        %v681 = vsub.f32 1.5, %v680
        %v682 = vmul.f32 %v677, %v681
        %v683 = vmul.f32 %v675, %v682
        %vm684 = vcmp.eq.f32.partialorder %v675, inf
        %v685 = vsel %vm684, %v675, %v683
        %vm686 = vcmp.eq.f32.partialorder %v675, 0.0
        %v687 = vand.u32 %v675, 2147483648
        %v688 = vsel %vm686, %v687, %v685
        %v689 = vrsqrt.pop %v676
        %v690 = vmul.f32 %v689, %v676
        %v691 = vmul.f32 %v690, %v689
        %v692 = vmul.f32 0.5, %v691
        %v693 = vsub.f32 1.5, %v692
        %v694 = vmul.f32 %v689, %v693
        %v695 = vmul.f32 %v676, %v694
        %vm696 = vcmp.eq.f32.partialorder %v676, inf
        %v697 = vsel %vm696, %v676, %v695
        %vm698 = vcmp.eq.f32.partialorder %v676, 0.0
        %v699 = vand.u32 %v676, 2147483648
        %v700 = vsel %vm698, %v699, %v697
        %s701 = sld [smem:[#allocation2]]
        %v702 = vstv %s701
        %v703 = vmul.f32 %v688, %v702
        %v704 = vmul.f32 %v700, %v702
        %s705 = sld [smem:[#allocation2 + $0x1]]
        %v706 = vstv %s705
        %v707 = vmul.f32 %v688, %v706
        %v708 = vmul.f32 %v700, %v706
        %v711 = vrot.slane %v707, 1
        %v712 = vrot.slane %v708, 1
        %v715 = vadd.f32 %v703, %v711
        %v716 = vadd.f32 %v704, %v712
        %s717 = sld [smem:[#allocation2 + $0x2]]
        %v718 = vstv %s717
        %v719 = vmul.f32 %v688, %v718
        %v720 = vmul.f32 %v700, %v718
        %v723 = vrot.slane %v719, 2
        %v724 = vrot.slane %v720, 2
        %v727 = vadd.f32 %v715, %v723
        %v728 = vadd.f32 %v716, %v724
        %s729 = sld [smem:[#allocation4]]
        %v730 = vstv %s729
        %v731 = vadd.f32 %v727, %v730
        %v732 = vadd.f32 %v728, %v730
        %v733 = vmax.f32 %v731, 0.0
        %v734 = vmax.f32 %v732, 0.0
        %s735 = sld [smem:[#allocation2 + $0x80]]
        %v736 = vstv %s735
        %v737 = vmul.f32 %v688, %v736
        %v738 = vmul.f32 %v700, %v736
        %s739 = sld [smem:[#allocation2 + $0x81]]
        %v740 = vstv %s739
        %v741 = vmul.f32 %v688, %v740
        %v742 = vmul.f32 %v700, %v740
        %v745 = vrot.slane %v741, 1
        %v746 = vrot.slane %v742, 1
        %v749 = vadd.f32 %v737, %v745
        %v750 = vadd.f32 %v738, %v746
        %s751 = sld [smem:[#allocation2 + $0x82]]
        %v752 = vstv %s751
        %v753 = vmul.f32 %v688, %v752
        %v754 = vmul.f32 %v700, %v752
        %v757 = vrot.slane %v753, 2
        %v758 = vrot.slane %v754, 2
        %v761 = vadd.f32 %v749, %v757
        %v762 = vadd.f32 %v750, %v758
        %s763 = sld [smem:[#allocation4 + $0x1]]
        %v764 = vstv %s763
        %v765 = vadd.f32 %v761, %v764
        %v766 = vadd.f32 %v762, %v764
        %v767 = vmax.f32 %v765, 0.0
        %v768 = vmax.f32 %v766, 0.0
        %s769 = sld [smem:[#allocation2 + $0x100]]
        %v770 = vstv %s769
        %v771 = vmul.f32 %v688, %v770
        %v772 = vmul.f32 %v700, %v770
        %s773 = sld [smem:[#allocation2 + $0x101]]
        %v774 = vstv %s773
        %v775 = vmul.f32 %v688, %v774
        %v776 = vmul.f32 %v700, %v774
        %v779 = vrot.slane %v775, 1
        %v780 = vrot.slane %v776, 1
        %v783 = vadd.f32 %v771, %v779
        %v784 = vadd.f32 %v772, %v780
        %s785 = sld [smem:[#allocation2 + $0x102]]
        %v786 = vstv %s785
        %v787 = vmul.f32 %v688, %v786
        %v788 = vmul.f32 %v700, %v786
        %v791 = vrot.slane %v787, 2
        %v792 = vrot.slane %v788, 2
        %v795 = vadd.f32 %v783, %v791
        %v796 = vadd.f32 %v784, %v792
        %s797 = sld [smem:[#allocation4 + $0x2]]
        %v798 = vstv %s797
        %v799 = vadd.f32 %v795, %v798
        %v800 = vadd.f32 %v796, %v798
        %v801 = vmax.f32 %v799, 0.0
        %v802 = vmax.f32 %v800, 0.0
        %s803 = sld [smem:[#allocation2 + $0x180]]
        %v804 = vstv %s803
        %v805 = vmul.f32 %v688, %v804
        %v806 = vmul.f32 %v700, %v804
        %s807 = sld [smem:[#allocation2 + $0x181]]
        %v808 = vstv %s807
        %v809 = vmul.f32 %v688, %v808
        %v810 = vmul.f32 %v700, %v808
        %v813 = vrot.slane %v809, 1
        %v814 = vrot.slane %v810, 1
        %v817 = vadd.f32 %v805, %v813
        %v818 = vadd.f32 %v806, %v814
        %s819 = sld [smem:[#allocation2 + $0x182]]
        %v820 = vstv %s819
        %v821 = vmul.f32 %v688, %v820
        %v822 = vmul.f32 %v700, %v820
        %v825 = vrot.slane %v821, 2
        %v826 = vrot.slane %v822, 2
        %v829 = vadd.f32 %v817, %v825
        %v830 = vadd.f32 %v818, %v826
        %s831 = sld [smem:[#allocation4 + $0x3]]
        %v832 = vstv %s831
        %v833 = vadd.f32 %v829, %v832
        %v834 = vadd.f32 %v830, %v832
        %v835 = vmax.f32 %v833, 0.0
        %v836 = vmax.f32 %v834, 0.0
        %s837 = sld [smem:[#allocation2 + $0x200]]
        %v838 = vstv %s837
        %v839 = vmul.f32 %v688, %v838
        %v840 = vmul.f32 %v700, %v838
        %s841 = sld [smem:[#allocation2 + $0x201]]
        %v842 = vstv %s841
        %v843 = vmul.f32 %v688, %v842
        %v844 = vmul.f32 %v700, %v842
        %v847 = vrot.slane %v843, 1
        %v848 = vrot.slane %v844, 1
        %v851 = vadd.f32 %v839, %v847
        %v852 = vadd.f32 %v840, %v848
        %s853 = sld [smem:[#allocation2 + $0x202]]
        %v854 = vstv %s853
        %v855 = vmul.f32 %v688, %v854
        %v856 = vmul.f32 %v700, %v854
        %v859 = vrot.slane %v855, 2
        %v860 = vrot.slane %v856, 2
        %v863 = vadd.f32 %v851, %v859
        %v864 = vadd.f32 %v852, %v860
        %s865 = sld [smem:[#allocation4 + $0x4]]
        %v866 = vstv %s865
        %v867 = vadd.f32 %v863, %v866
        %v868 = vadd.f32 %v864, %v866
        %v869 = vmax.f32 %v867, 0.0
        %v870 = vmax.f32 %v868, 0.0
        %s871 = sld [smem:[#allocation2 + $0x280]]
        %v872 = vstv %s871
        %v873 = vmul.f32 %v688, %v872
        %v874 = vmul.f32 %v700, %v872
        %s875 = sld [smem:[#allocation2 + $0x281]]
        %v876 = vstv %s875
        %v877 = vmul.f32 %v688, %v876
        %v878 = vmul.f32 %v700, %v876
        %v881 = vrot.slane %v877, 1
        %v882 = vrot.slane %v878, 1
        %v885 = vadd.f32 %v873, %v881
        %v886 = vadd.f32 %v874, %v882
        %s887 = sld [smem:[#allocation2 + $0x282]]
        %v888 = vstv %s887
        %v889 = vmul.f32 %v688, %v888
        %v890 = vmul.f32 %v700, %v888
        %v893 = vrot.slane %v889, 2
        %v894 = vrot.slane %v890, 2
        %v897 = vadd.f32 %v885, %v893
        %v898 = vadd.f32 %v886, %v894
        %s899 = sld [smem:[#allocation4 + $0x5]]
        %v900 = vstv %s899
        %v901 = vadd.f32 %v897, %v900
        %v902 = vadd.f32 %v898, %v900
        %v903 = vmax.f32 %v901, 0.0
        %v904 = vmax.f32 %v902, 0.0
        %s905 = sld [smem:[#allocation2 + $0x300]]
        %v906 = vstv %s905
        %v907 = vmul.f32 %v688, %v906
        %v908 = vmul.f32 %v700, %v906
        %s909 = sld [smem:[#allocation2 + $0x301]]
        %v910 = vstv %s909
        %v911 = vmul.f32 %v688, %v910
        %v912 = vmul.f32 %v700, %v910
        %v915 = vrot.slane %v911, 1
        %v916 = vrot.slane %v912, 1
        %v919 = vadd.f32 %v907, %v915
        %v920 = vadd.f32 %v908, %v916
        %s921 = sld [smem:[#allocation2 + $0x302]]
        %v922 = vstv %s921
        %v923 = vmul.f32 %v688, %v922
        %v924 = vmul.f32 %v700, %v922
        %v927 = vrot.slane %v923, 2
        %v928 = vrot.slane %v924, 2
        %v931 = vadd.f32 %v919, %v927
        %v932 = vadd.f32 %v920, %v928
        %s933 = sld [smem:[#allocation4 + $0x6]]
        %v934 = vstv %s933
        %v935 = vadd.f32 %v931, %v934
        %v936 = vadd.f32 %v932, %v934
        %v937 = vmax.f32 %v935, 0.0
        %v938 = vmax.f32 %v936, 0.0
        %s939 = sld [smem:[#allocation2 + $0x380]]
        %v940 = vstv %s939
        %v941 = vmul.f32 %v688, %v940
        %v942 = vmul.f32 %v700, %v940
        %s943 = sld [smem:[#allocation2 + $0x381]]
        %v944 = vstv %s943
        %v945 = vmul.f32 %v688, %v944
        %v946 = vmul.f32 %v700, %v944
        %v949 = vrot.slane %v945, 1
        %v950 = vrot.slane %v946, 1
        %v953 = vadd.f32 %v941, %v949
        %v954 = vadd.f32 %v942, %v950
        %s955 = sld [smem:[#allocation2 + $0x382]]
        %v956 = vstv %s955
        %v957 = vmul.f32 %v688, %v956
        %v958 = vmul.f32 %v700, %v956
        %v961 = vrot.slane %v957, 2
        %v962 = vrot.slane %v958, 2
        %v965 = vadd.f32 %v953, %v961
        %v966 = vadd.f32 %v954, %v962
        %s967 = sld [smem:[#allocation4 + $0x7]]
        %v968 = vstv %s967
        %v969 = vadd.f32 %v965, %v968
        %v970 = vadd.f32 %v966, %v968
        %v971 = vmax.f32 %v969, 0.0
        %v972 = vmax.f32 %v970, 0.0
        %s973 = sld [smem:[#allocation6]]
        %v974 = vstv %s973
        %v975 = vmul.f32 %v733, %v974
        %v976 = vmul.f32 %v734, %v974
        %s977 = sld [smem:[#allocation6 + $0x1]]
        %v978 = vstv %s977
        %v979 = vmul.f32 %v767, %v978
        %v980 = vmul.f32 %v768, %v978
        %v981 = vadd.f32 %v975, %v979
        %v982 = vadd.f32 %v976, %v980
        %s983 = sld [smem:[#allocation6 + $0x2]]
        %v984 = vstv %s983
        %v985 = vmul.f32 %v801, %v984
        %v986 = vmul.f32 %v802, %v984
        %v987 = vadd.f32 %v981, %v985
        %v988 = vadd.f32 %v982, %v986
        %s989 = sld [smem:[#allocation6 + $0x3]]
        %v990 = vstv %s989
        %v991 = vmul.f32 %v835, %v990
        %v992 = vmul.f32 %v836, %v990
        %v993 = vadd.f32 %v987, %v991
        %v994 = vadd.f32 %v988, %v992
        %s995 = sld [smem:[#allocation6 + $0x4]]
        %v996 = vstv %s995
        %v997 = vmul.f32 %v869, %v996
        %v998 = vmul.f32 %v870, %v996
        %v999 = vadd.f32 %v993, %v997
        %v1000 = vadd.f32 %v994, %v998
        %s1001 = sld [smem:[#allocation6 + $0x5]]
        %v1002 = vstv %s1001
        %v1003 = vmul.f32 %v903, %v1002
        %v1004 = vmul.f32 %v904, %v1002
        %v1005 = vadd.f32 %v999, %v1003
        %v1006 = vadd.f32 %v1000, %v1004
        %s1007 = sld [smem:[#allocation6 + $0x6]]
        %v1008 = vstv %s1007
        %v1009 = vmul.f32 %v937, %v1008
        %v1010 = vmul.f32 %v938, %v1008
        %v1011 = vadd.f32 %v1005, %v1009
        %v1012 = vadd.f32 %v1006, %v1010
        %s1013 = sld [smem:[#allocation6 + $0x7]]
        %v1014 = vstv %s1013
        %v1015 = vmul.f32 %v971, %v1014
        %v1016 = vmul.f32 %v972, %v1014
        %v1017 = vadd.f32 %v1011, %v1015
        %v1018 = vadd.f32 %v1012, %v1016
        %s1019 = sld [smem:[#allocation7]]
        %v1020 = vstv %s1019
        %v1021 = vadd.f32 %v1017, %v1020
        %v1022 = vadd.f32 %v1018, %v1020
        %v1023 = vadd.f32 %v1021, %v688
        %v1024 = vadd.f32 %v1022, %v700
        %v1025 = vmax.f32 %v1023, 0.0
        %v1026 = vmax.f32 %v1024, 0.0
        %v1027 = vmin.f32 %v1025, 1.0
        %v1028 = vmin.f32 %v1026, 1.0
        %s1029 = sld [smem:[#allocation6 + $0x80]]
        %v1030 = vstv %s1029
        %v1031 = vmul.f32 %v733, %v1030
        %v1032 = vmul.f32 %v734, %v1030
        %s1033 = sld [smem:[#allocation6 + $0x81]]
        %v1034 = vstv %s1033
        %v1035 = vmul.f32 %v767, %v1034
        %v1036 = vmul.f32 %v768, %v1034
        %v1037 = vadd.f32 %v1031, %v1035
        %v1038 = vadd.f32 %v1032, %v1036
        %s1039 = sld [smem:[#allocation6 + $0x82]]
        %v1040 = vstv %s1039
        %v1041 = vmul.f32 %v801, %v1040
        %v1042 = vmul.f32 %v802, %v1040
        %v1043 = vadd.f32 %v1037, %v1041
        %v1044 = vadd.f32 %v1038, %v1042
        %s1045 = sld [smem:[#allocation6 + $0x83]]
        %v1046 = vstv %s1045
        %v1047 = vmul.f32 %v835, %v1046
        %v1048 = vmul.f32 %v836, %v1046
        %v1049 = vadd.f32 %v1043, %v1047
        %v1050 = vadd.f32 %v1044, %v1048
        %s1051 = sld [smem:[#allocation6 + $0x84]]
        %v1052 = vstv %s1051
        %v1053 = vmul.f32 %v869, %v1052
        %v1054 = vmul.f32 %v870, %v1052
        %v1055 = vadd.f32 %v1049, %v1053
        %v1056 = vadd.f32 %v1050, %v1054
        %s1057 = sld [smem:[#allocation6 + $0x85]]
        %v1058 = vstv %s1057
        %v1059 = vmul.f32 %v903, %v1058
        %v1060 = vmul.f32 %v904, %v1058
        %v1061 = vadd.f32 %v1055, %v1059
        %v1062 = vadd.f32 %v1056, %v1060
        %s1063 = sld [smem:[#allocation6 + $0x86]]
        %v1064 = vstv %s1063
        %v1065 = vmul.f32 %v937, %v1064
        %v1066 = vmul.f32 %v938, %v1064
        %v1067 = vadd.f32 %v1061, %v1065
        %v1068 = vadd.f32 %v1062, %v1066
        %s1069 = sld [smem:[#allocation6 + $0x87]]
        %v1070 = vstv %s1069
        %v1071 = vmul.f32 %v971, %v1070
        %v1072 = vmul.f32 %v972, %v1070
        %v1073 = vadd.f32 %v1067, %v1071
        %v1074 = vadd.f32 %v1068, %v1072
        %s1075 = sld [smem:[#allocation7 + $0x1]]
        %v1076 = vstv %s1075
        %v1077 = vadd.f32 %v1073, %v1076
        %v1078 = vadd.f32 %v1074, %v1076
        %v1081 = vrot.slane %v688, 1
        %v1082 = vrot.slane %v700, 1
        %v1085 = vadd.f32 %v1077, %v1081
        %v1086 = vadd.f32 %v1078, %v1082
        %v1087 = vmax.f32 %v1085, 0.0
        %v1088 = vmax.f32 %v1086, 0.0
        %v1089 = vmin.f32 %v1087, 1.0
        %v1090 = vmin.f32 %v1088, 1.0
        %s1091 = sld [smem:[#allocation6 + $0x100]]
        %v1092 = vstv %s1091
        %v1093 = vmul.f32 %v733, %v1092
        %v1094 = vmul.f32 %v734, %v1092
        %s1095 = sld [smem:[#allocation6 + $0x101]]
        %v1096 = vstv %s1095
        %v1097 = vmul.f32 %v767, %v1096
        %v1098 = vmul.f32 %v768, %v1096
        %v1099 = vadd.f32 %v1093, %v1097
        %v1100 = vadd.f32 %v1094, %v1098
        %s1101 = sld [smem:[#allocation6 + $0x102]]
        %v1102 = vstv %s1101
        %v1103 = vmul.f32 %v801, %v1102
        %v1104 = vmul.f32 %v802, %v1102
        %v1105 = vadd.f32 %v1099, %v1103
        %v1106 = vadd.f32 %v1100, %v1104
        %s1107 = sld [smem:[#allocation6 + $0x103]]
        %v1108 = vstv %s1107
        %v1109 = vmul.f32 %v835, %v1108
        %v1110 = vmul.f32 %v836, %v1108
        %v1111 = vadd.f32 %v1105, %v1109
        %v1112 = vadd.f32 %v1106, %v1110
        %s1113 = sld [smem:[#allocation6 + $0x104]]
        %v1114 = vstv %s1113
        %v1115 = vmul.f32 %v869, %v1114
        %v1116 = vmul.f32 %v870, %v1114
        %v1117 = vadd.f32 %v1111, %v1115
        %v1118 = vadd.f32 %v1112, %v1116
        %s1119 = sld [smem:[#allocation6 + $0x105]]
        %v1120 = vstv %s1119
        %v1121 = vmul.f32 %v903, %v1120
        %v1122 = vmul.f32 %v904, %v1120
        %v1123 = vadd.f32 %v1117, %v1121
        %v1124 = vadd.f32 %v1118, %v1122
        %s1125 = sld [smem:[#allocation6 + $0x106]]
        %v1126 = vstv %s1125
        %v1127 = vmul.f32 %v937, %v1126
        %v1128 = vmul.f32 %v938, %v1126
        %v1129 = vadd.f32 %v1123, %v1127
        %v1130 = vadd.f32 %v1124, %v1128
        %s1131 = sld [smem:[#allocation6 + $0x107]]
        %v1132 = vstv %s1131
        %v1133 = vmul.f32 %v971, %v1132
        %v1134 = vmul.f32 %v972, %v1132
        %v1135 = vadd.f32 %v1129, %v1133
        %v1136 = vadd.f32 %v1130, %v1134
        %s1137 = sld [smem:[#allocation7 + $0x2]]
        %v1138 = vstv %s1137
        %v1139 = vadd.f32 %v1135, %v1138
        %v1140 = vadd.f32 %v1136, %v1138
        %v1141 = vrot.slane %v688, 2
        %v1142 = vrot.slane %v700, 2
        %v1145 = vadd.f32 %v1139, %v1141
        %v1146 = vadd.f32 %v1140, %v1142
        %v1147 = vmax.f32 %v1145, 0.0
        %v1148 = vmax.f32 %v1146, 0.0
        %v1149 = vmin.f32 %v1147, 1.0
        %v1150 = vmin.f32 %v1148, 1.0
        %v1153 = vrot.slane %v1089, 7
        %v1154 = vrot.slane %v1090, 7
        %v1159 = vrot.slane %v1149, 6
        %v1160 = vrot.slane %v1150, 6
        %vm1163 = vcmask 1040384
        %v1164 = vsel %vm1163, %v1027, %v1153
        %v1165 = vsel %vm1163, %v1028, %v1154
        %vm1166 = vcmask 1041408
        %v1167 = vsel %vm1166, %v1164, %v1159
        %v1168 = vsel %vm1166, %v1165, %v1160
        %v1171 = vrot.slane %v1168, 4
        %v1172 = vsel %vm606, %v1167, %v1171
        %1174 = vst [vmem:[%s330] sm:$0x77] %v1172
        %p1175 = scmp.lt.s32.totalorder %s21, 1
        %s1176 = scalar_select %p1175, %s21, 1
        %s1177 = smul.addr %s1176, 2
        %s1178 = smul.addr %s1177, 4
        %s1179 = scalar_lea.vmem %s7, %s1178
        // Predicated region
        $region65: #{lightnet_forward.1} parent=47 // pred_check
          %p1180 = pneg %p191
        $region66: #{lightnet_forward.1} parent=47 // pred_check_branch
          %1182 = sbr.rel (%p1180) target = $region68
        $region67: #{lightnet_forward.1} parent=47 // pred_region
          _
        $region68: #{lightnet_forward.1} parent=47 // pred_fallthru
          _
      $region48: #{lightnet_forward.1} parent=5 // pred_fallthru
        _
      %p1183 = scmp.le.s32.totalorder 2, %s16
      // Predicated region
      $region69: #{lightnet_forward.1} parent=5 // pred_check
        %p1184 = pneg %p1183
      $region70: #{lightnet_forward.1} parent=5 // pred_check_branch
        %1186 = sbr.rel (%p1184) target = $region72
      $region71: #{lightnet_forward.1} parent=5 // pred_region
        %s1187 = ssub.s32 %s16, 2
        // Predicated region
        $region73: #{lightnet_forward.1} parent=71 // pred_check
          %p1188 = pneg %p197
        $region74: #{lightnet_forward.1} parent=71 // pred_check_branch
          %1190 = sbr.rel (%p1188) target = $region76
        $region75: #{lightnet_forward.1} parent=71 // pred_region
          %p1191 = scmp.lt.s32.totalorder %s22, 1
          %s1192 = scalar_select %p1191, %s22, 1
          %s1193 = smul.addr %s1192, 2
          %s1194 = smul.addr %s1193, 4
          %s1195 = scalar_lea.vmem %s7, %s1194
        $region76: #{lightnet_forward.1} parent=71 // pred_fallthru
          _
      $region72: #{lightnet_forward.1} parent=5 // pred_fallthru
        _
    $region6: #{lightnet_forward.1} parent=1 // loop_footer
      %s20 = sadd.s32 1, %s16
    $region7: #{lightnet_forward.1} parent=1 // loop_footer_branch
      %15 = sbr.rel target = $region3
    $region8: #{lightnet_forward.1} parent=1 // loop_exit
      _
    %1196 = vsyncpa [#allocation3], 1
    %s1197 = scalar_lea.sflag [#allocation3], 1
    %1198 = vsyncpa %s1197, 1
    %1199 = vsyncpa [#allocation5], 1
    %1200 = vsyncpa [#allocation8], 1

</llo_original>
